<compile_context>
chip_gen: v6e
topology: v6e:2x2x1
jax: 0.10.0
libtpu: 0.0.40
codegen_flags: <defaults>
</compile_context>

<pallas_src>
import jax
import jax.numpy as jnp
from jax.experimental import pallas as pl
from jax.experimental.pallas import tpu as pltpu


def lstm_char_tagger_kernel(
    word_ids_ref,      # [W, 1]     i32  word ids (0 in padded rows)
    char_ids_ref,      # [T*W, 1]   i32  time-major flattened char ids
    char_lens_ref,     # [W, 1]     i32  chars per word (0 for padded words)
    word_emb_ref,      # [V, Dw]    f32  word embedding table
    char_emb_ref,      # [C, Dc]    f32  char embedding table
    wih_c_ref,         # [Dc, 4*Hc] f32  char-LSTM input weights (T, g-cols x2)
    whh_c_ref,         # [Hc, 4*Hc] bf16 char-LSTM recurrent weights (T, g x2)
    b_c_ref,           # [1, 4*Hc]  f32  char-LSTM bias (b_ih+b_hh, g-cols x2)
    wih_w_ref,         # [Dw, 4*H]  f32  word-LSTM input weights, word part
    wih_h_ref,         # [Hc, 4*H]  f32  word-LSTM input weights, char part
    whh_w_ref,         # [H, 4*H]   bf16 word-LSTM recurrent weights
    b_w_ref,           # [1, 4*H]   f32  word-LSTM bias
    wtag_ref,          # [H, TagP]  f32  hidden2tag weight (0-padded cols)
    btag_ref,          # [1, TagP]  f32  hidden2tag bias (-1e30 in padded cols)
    out_ref,           # [W, TagP]  f32  log-softmax tag scores
):
    W = word_ids_ref.shape[0]
    TW = char_ids_ref.shape[0]
    T = TW // W                         # static
    Hc = whh_c_ref.shape[0]
    H = whh_w_ref.shape[0]
    V = word_emb_ref.shape[0]
    C = char_emb_ref.shape[0]
    f32 = jnp.float32
    bf16 = jnp.bfloat16

    # ---- embedding gathers as one-hot matmuls (tables are a few KiB) --------
    word_oh = (word_ids_ref[...] ==
               jax.lax.broadcasted_iota(jnp.int32, (W, V), 1)).astype(f32)
    word_embeds = jnp.dot(word_oh, word_emb_ref[...],
                          preferred_element_type=f32)               # [W, Dw]
    char_oh = (char_ids_ref[...] ==
               jax.lax.broadcasted_iota(jnp.int32, (TW, C), 1)).astype(f32)
    char_embeds = jnp.dot(char_oh, char_emb_ref[...],
                          preferred_element_type=f32)               # [T*W, Dc]

    # ---- hoisted char-LSTM input projection: one matmul, value-resident -----
    xp_c = (jnp.dot(char_embeds, wih_c_ref[...], preferred_element_type=f32)
            + b_c_ref[...])                                         # [T*W, 4Hc]

    lens = char_lens_ref[...]            # [W, 1]
    whh_c = whh_c_ref[...]               # bf16, resident across the loop

    # ---- char-level LSTM: all W words as a batch, T steps, fully unrolled ---
    h = jnp.zeros((W, Hc), f32)
    c = jnp.zeros((W, Hc), f32)
    for t in range(T):                              # static -> unrolled
        xp_t = xp_c[t * W:(t + 1) * W, :]           # static sublane-aligned slice
        gates = xp_t + jnp.dot(h.astype(bf16), whh_c,
                               preferred_element_type=f32)
        sig = jax.nn.sigmoid(gates)                 # single EUP slab per step
        i_g = sig[:, 0 * Hc:1 * Hc]
        f_g = sig[:, 1 * Hc:2 * Hc]
        g_g = 2.0 * sig[:, 2 * Hc:3 * Hc] - 1.0     # tanh(x)=2*sigmoid(2x)-1 (VPU)
        o_g = sig[:, 3 * Hc:4 * Hc]
        c_new = f_g * c + i_g * g_g
        h_new = o_g * jnp.tanh(c_new)
        # only advance state while t < len(word) -> final h == hidden at the
        # last real character (same as pack_sequence + take-last in PyTorch)
        valid = t < lens
        h = jnp.where(valid, h_new, h)
        c = jnp.where(valid, c_new, c)
    char_lvl = h                                    # [W, Hc]

    # ---- merged input projection for the word LSTM (concat done implicitly:
    #      [word_embeds | char_lvl] @ W_ih == we @ W_ih_w + cl @ W_ih_h) ------
    xproj = (jnp.dot(word_embeds, wih_w_ref[...], preferred_element_type=f32)
             + jnp.dot(char_lvl, wih_h_ref[...], preferred_element_type=f32)
             + b_w_ref[...])                        # [W, 4H]

    whh_w = whh_w_ref[...]                          # bf16, resident
    # ---- word-level LSTM, batch = 1, seq len W, fully unrolled --------------
    # (recurrence is causal, so padded trailing rows never affect real rows)
    h1 = jnp.zeros((1, H), f32)
    c1 = jnp.zeros((1, H), f32)
    h_rows = []
    for w in range(W):                              # static -> unrolled
        gates = xproj[w:w + 1, :] + jnp.dot(h1.astype(bf16), whh_w,
                                            preferred_element_type=f32)
        sig = jax.nn.sigmoid(gates)                 # single EUP slab per step
        i_g = sig[:, 0 * H:1 * H]
        f_g = sig[:, 1 * H:2 * H]
        g_g = 2.0 * sig[:, 2 * H:3 * H] - 1.0
        o_g = sig[:, 3 * H:4 * H]
        c1 = f_g * c1 + i_g * g_g
        h1 = o_g * jnp.tanh(c1)
        h_rows.append(h1)
    hseq = jnp.concatenate(h_rows, axis=0)          # [W, H]

    # ---- hidden2tag + log_softmax (padded tag cols carry -1e30 bias) --------
    tag_space = (jnp.dot(hseq, wtag_ref[...], preferred_element_type=f32)
                 + btag_ref[...])                   # [W, TagP]
    m = jnp.max(tag_space, axis=1, keepdims=True)
    z = tag_space - m
    lse = jnp.log(jnp.sum(jnp.exp(z), axis=1, keepdims=True))
    out_ref[...] = z - lse                          # lane-dense unmasked store


def _scale_g_gate(w, hidden):
    """Pre-scale the g-gate block (slot 2 of packed [i|f|g|o] on the last axis)
    by 2 so the kernel can compute tanh(g) as 2*sigmoid(2g)-1 (one EUP pass)."""
    return w.at[..., 2 * hidden:3 * hidden].multiply(2.0)


def lstm_char_tagger_forward(word_sequence, char_ids_padded, char_lens, params,
                             tagset_size):
    W = int(word_sequence.shape[0])
    T = int(char_ids_padded.shape[1])
    Hc = params["whh_c"].shape[0]
    H = params["whh_w"].shape[0]

    W_pad = ((W + 7) // 8) * 8                       # sublane-full rows
    TAG_PAD = ((tagset_size + 127) // 128) * 128     # lane-dense output axis

    # --- integer-id plumbing only; all float gathers happen inside the kernel
    word_ids = jnp.pad(word_sequence.astype(jnp.int32),
                       (0, W_pad - W)).reshape(W_pad, 1)
    char_ids = jnp.pad(char_ids_padded.astype(jnp.int32),
                       ((0, W_pad - W), (0, 0)))
    char_ids_flat = jnp.transpose(char_ids, (1, 0)).reshape(T * W_pad, 1)
    lens = jnp.pad(char_lens.astype(jnp.int32), (0, W_pad - W)).reshape(W_pad, 1)

    # --- gate prep: g-gate columns x2 (tanh-via-sigmoid); recurrent weights
    #     bf16 for single-pass MXU on the serial recurrence (state stays f32)
    wih_c = _scale_g_gate(params["wih_c"], Hc)
    whh_c = _scale_g_gate(params["whh_c"], Hc).astype(jnp.bfloat16)
    b_c = _scale_g_gate(params["b_c"], Hc)
    wih_w = _scale_g_gate(params["wih_w"], H)
    wih_h = _scale_g_gate(params["wih_h"], H)
    whh_w = _scale_g_gate(params["whh_w"], H).astype(jnp.bfloat16)
    b_w = _scale_g_gate(params["b_w"], H)

    # tag-axis padding: zero weight columns, -1e30 bias in padded columns so
    # the log-softmax normalizer only sees real tags
    wtag_p = jnp.zeros((H, TAG_PAD), jnp.float32).at[:, :tagset_size].set(
        params["wtag"])
    btag_p = jnp.full((1, TAG_PAD), -1e30, jnp.float32).at[:, :tagset_size].set(
        params["btag"])

    vmem = pl.BlockSpec(memory_space=pltpu.MemorySpace.VMEM)
    inputs = (
        word_ids, char_ids_flat, lens,
        params["word_emb"], params["char_emb"],
        wih_c, whh_c, b_c,
        wih_w, wih_h, whh_w, b_w,
        wtag_p, btag_p,
    )
    out = pl.pallas_call(
        lstm_char_tagger_kernel,
        out_shape=jax.ShapeDtypeStruct((W_pad, TAG_PAD), jnp.float32),
        in_specs=[vmem] * len(inputs),
        out_specs=vmem,
    )(*inputs)
    # TODO(synk): for large T*W, tile the char/time axis with a grid+BlockSpec
    # (or manual double-buffered make_async_copy) instead of whole-slab VMEM.
    return out[:W, :tagset_size]


def make_params(key, Dw, Dc, H, Hc, vocab, charset, tagset):
    """Deterministic synthetic parameters, PyTorch-style uniform(+-1/sqrt(h))."""
    ks = jax.random.split(key, 12)

    def unif(k, shape, bound):
        return jax.random.uniform(k, shape, jnp.float32, -bound, bound)

    bc = 1.0 / jnp.sqrt(Hc)
    bw = 1.0 / jnp.sqrt(H)
    return {
        # embedding tables (N(0,1), like nn.Embedding default)
        "word_emb": jax.random.normal(ks[0], (vocab, Dw), jnp.float32),
        "char_emb": jax.random.normal(ks[1], (charset, Dc), jnp.float32),
        # char LSTM (weights stored transposed: [in, 4*Hc] / [Hc, 4*Hc])
        "wih_c": unif(ks[2], (Dc, 4 * Hc), bc),
        "whh_c": unif(ks[3], (Hc, 4 * Hc), bc),
        "b_c": unif(ks[4], (1, 4 * Hc), bc) + unif(ks[5], (1, 4 * Hc), bc),
        # word LSTM: input dim Dw + Hc, split into word / char-level blocks
        "wih_w": unif(ks[6], (Dw, 4 * H), bw),
        "wih_h": unif(ks[7], (Hc, 4 * H), bw),
        "whh_w": unif(ks[8], (H, 4 * H), bw),
        "b_w": unif(ks[9], (1, 4 * H), bw) + unif(ks[10], (1, 4 * H), bw),
        # hidden2tag
        "wtag": unif(ks[11], (H, tagset), bw),
        "btag": jnp.zeros((1, tagset), jnp.float32),
    }


if __name__ == "__main__":
    # small deterministic problem
    word_embedding_dim = 16
    char_embedding_dim = 8
    hidden_dim = 32
    hidden_char_dim = 16
    vocab_size = 40
    charset_size = 26
    tagset_size = 10

    num_words = 6          # W
    max_chars = 10         # T_max (pad length for char sequences)

    key = jax.random.PRNGKey(0)
    kp, kw, kc = jax.random.split(key, 3)
    params = make_params(kp, word_embedding_dim, char_embedding_dim,
                         hidden_dim, hidden_char_dim,
                         vocab_size, charset_size, tagset_size)

    # word_sequence: [W] int ids; char_sequence: variable-length char ids/word,
    # given as a padded [W, T_max] id matrix + per-word lengths
    word_sequence = jax.random.randint(kw, (num_words,), 0, vocab_size)
    char_lens = jnp.array([5, 3, 9, 2, 7, 4], dtype=jnp.int32)
    char_ids_padded = jax.random.randint(kc, (num_words, max_chars),
                                         0, charset_size)

    tag_scores = lstm_char_tagger_forward(
        word_sequence, char_ids_padded, char_lens, params, tagset_size)
    tag_scores = jax.block_until_ready(tag_scores)

    assert tag_scores.shape == (num_words, tagset_size)
    assert bool(jnp.all(jnp.isfinite(tag_scores)))
    # rows of log_softmax must exponentiate-sum to 1
    row_sums = jnp.sum(jnp.exp(tag_scores), axis=1)
    assert bool(jnp.all(jnp.abs(row_sums - 1.0) < 1e-4))

    print("KERNEL_OK")
</pallas_src>

<mosaic_0001>
module attributes {stable_mosaic.version = 11 : i64} {
  func.func @lstm_char_tagger_kernel(%arg0: memref<8x1xi32, #tpu.memory_space<vmem>>, %arg1: memref<80x1xi32, #tpu.memory_space<vmem>>, %arg2: memref<8x1xi32, #tpu.memory_space<vmem>>, %arg3: memref<40x16xf32, #tpu.memory_space<vmem>>, %arg4: memref<26x8xf32, #tpu.memory_space<vmem>>, %arg5: memref<8x64xf32, #tpu.memory_space<vmem>>, %arg6: memref<16x64xbf16, #tpu.memory_space<vmem>>, %arg7: memref<1x64xf32, #tpu.memory_space<vmem>>, %arg8: memref<16x128xf32, #tpu.memory_space<vmem>>, %arg9: memref<16x128xf32, #tpu.memory_space<vmem>>, %arg10: memref<32x128xbf16, #tpu.memory_space<vmem>>, %arg11: memref<1x128xf32, #tpu.memory_space<vmem>>, %arg12: memref<32x128xf32, #tpu.memory_space<vmem>>, %arg13: memref<1x128xf32, #tpu.memory_space<vmem>>, %arg14: memref<8x128xf32, #tpu.memory_space<vmem>>) attributes {dimension_semantics = [], scalar_prefetch = 0 : i64, scratch_operands = 0 : i64, tpu.core_type = #tpu.core_type<tc>} {
    %c0 = arith.constant 0 : index
    %c0_0 = arith.constant 0 : index
    %0 = vector.load %arg0[%c0, %c0_0] : memref<8x1xi32, #tpu.memory_space<vmem>>, vector<8x1xi32>
    %1 = tpu.iota {dimensions = array<i32: 1>} : vector<8x40xi32>
    %2 = vector.broadcast %0 : vector<8x1xi32> to vector<8x40xi32>
    %3 = arith.cmpi eq, %2, %1 : vector<8x40xi32>
    %4 = arith.extui %3 : vector<8x40xi1> to vector<8x40xi32>
    %5 = arith.sitofp %4 : vector<8x40xi32> to vector<8x40xf32>
    %c0_1 = arith.constant 0 : index
    %c0_2 = arith.constant 0 : index
    %6 = vector.load %arg3[%c0_1, %c0_2] : memref<40x16xf32, #tpu.memory_space<vmem>>, vector<40x16xf32>
    %cst = arith.constant dense<0.000000e+00> : vector<8x16xf32>
    %7 = tpu.matmul %5, %6, %cst {dimension_numbers = #tpu.dot_dimension_numbers<[1], [0], [0], [1], [0, 0, 1, 1], [], []>} : vector<8x40xf32>, vector<40x16xf32>, vector<8x16xf32> -> vector<8x16xf32>
    %c0_3 = arith.constant 0 : index
    %c0_4 = arith.constant 0 : index
    %8 = vector.load %arg1[%c0_3, %c0_4] : memref<80x1xi32, #tpu.memory_space<vmem>>, vector<80x1xi32>
    %9 = tpu.iota {dimensions = array<i32: 1>} : vector<80x26xi32>
    %10 = vector.broadcast %8 : vector<80x1xi32> to vector<80x26xi32>
    %11 = arith.cmpi eq, %10, %9 : vector<80x26xi32>
    %12 = arith.extui %11 : vector<80x26xi1> to vector<80x26xi32>
    %13 = arith.sitofp %12 : vector<80x26xi32> to vector<80x26xf32>
    %c0_5 = arith.constant 0 : index
    %c0_6 = arith.constant 0 : index
    %14 = vector.load %arg4[%c0_5, %c0_6] : memref<26x8xf32, #tpu.memory_space<vmem>>, vector<26x8xf32>
    %cst_7 = arith.constant dense<0.000000e+00> : vector<80x8xf32>
    %15 = tpu.matmul %13, %14, %cst_7 {dimension_numbers = #tpu.dot_dimension_numbers<[1], [0], [0], [1], [0, 0, 1, 1], [], []>} : vector<80x26xf32>, vector<26x8xf32>, vector<80x8xf32> -> vector<80x8xf32>
    %c0_8 = arith.constant 0 : index
    %c0_9 = arith.constant 0 : index
    %16 = vector.load %arg5[%c0_8, %c0_9] : memref<8x64xf32, #tpu.memory_space<vmem>>, vector<8x64xf32>
    %cst_10 = arith.constant dense<0.000000e+00> : vector<80x64xf32>
    %17 = tpu.matmul %15, %16, %cst_10 {dimension_numbers = #tpu.dot_dimension_numbers<[1], [0], [0], [1], [0, 0, 1, 1], [], []>} : vector<80x8xf32>, vector<8x64xf32>, vector<80x64xf32> -> vector<80x64xf32>
    %c0_11 = arith.constant 0 : index
    %c0_12 = arith.constant 0 : index
    %18 = vector.load %arg7[%c0_11, %c0_12] : memref<1x64xf32, #tpu.memory_space<vmem>>, vector<1x64xf32>
    %19 = vector.broadcast %18 : vector<1x64xf32> to vector<80x64xf32>
    %20 = arith.addf %17, %19 : vector<80x64xf32>
    %c0_13 = arith.constant 0 : index
    %c0_14 = arith.constant 0 : index
    %21 = vector.load %arg2[%c0_13, %c0_14] : memref<8x1xi32, #tpu.memory_space<vmem>>, vector<8x1xi32>
    %c0_15 = arith.constant 0 : index
    %c0_16 = arith.constant 0 : index
    %22 = vector.load %arg6[%c0_15, %c0_16] : memref<16x64xbf16, #tpu.memory_space<vmem>>, vector<16x64xbf16>
    %cst_17 = arith.constant 0.000000e+00 : f32
    %23 = vector.broadcast %cst_17 : f32 to vector<8x16xf32>
    %cst_18 = arith.constant 0.000000e+00 : f32
    %24 = vector.broadcast %cst_18 : f32 to vector<8x16xf32>
    %25 = vector.extract_strided_slice %20 {offsets = [0, 0], sizes = [8, 64], strides = [1, 1]} : vector<80x64xf32> to vector<8x64xf32>
    %26 = arith.truncf %23 : vector<8x16xf32> to vector<8x16xbf16>
    %cst_19 = arith.constant dense<0.000000e+00> : vector<8x64xf32>
    %27 = tpu.matmul %26, %22, %cst_19 {dimension_numbers = #tpu.dot_dimension_numbers<[1], [0], [0], [1], [0, 0, 1, 1], [], []>} : vector<8x16xbf16>, vector<16x64xbf16>, vector<8x64xf32> -> vector<8x64xf32>
    %28 = arith.addf %25, %27 : vector<8x64xf32>
    %29 = arith.negf %28 : vector<8x64xf32>
    %30 = math.exp %29 : vector<8x64xf32>
    %cst_20 = arith.constant 1.000000e+00 : f32
    %31 = vector.broadcast %cst_20 : f32 to vector<8x64xf32>
    %32 = arith.addf %31, %30 : vector<8x64xf32>
    %33 = arith.divf %31, %32 : vector<8x64xf32>
    %34 = vector.extract_strided_slice %33 {offsets = [0, 0], sizes = [8, 16], strides = [1, 1]} : vector<8x64xf32> to vector<8x16xf32>
    %35 = vector.extract_strided_slice %33 {offsets = [0, 16], sizes = [8, 16], strides = [1, 1]} : vector<8x64xf32> to vector<8x16xf32>
    %36 = vector.extract_strided_slice %33 {offsets = [0, 32], sizes = [8, 16], strides = [1, 1]} : vector<8x64xf32> to vector<8x16xf32>
    %cst_21 = arith.constant 2.000000e+00 : f32
    %37 = vector.broadcast %cst_21 : f32 to vector<8x16xf32>
    %38 = arith.mulf %37, %36 : vector<8x16xf32>
    %cst_22 = arith.constant 1.000000e+00 : f32
    %39 = vector.broadcast %cst_22 : f32 to vector<8x16xf32>
    %40 = arith.subf %38, %39 : vector<8x16xf32>
    %41 = vector.extract_strided_slice %33 {offsets = [0, 48], sizes = [8, 16], strides = [1, 1]} : vector<8x64xf32> to vector<8x16xf32>
    %42 = arith.mulf %35, %24 : vector<8x16xf32>
    %43 = arith.mulf %34, %40 : vector<8x16xf32>
    %44 = arith.addf %42, %43 : vector<8x16xf32>
    %45 = math.tanh %44 : vector<8x16xf32>
    %46 = arith.mulf %41, %45 : vector<8x16xf32>
    %c0_i32 = arith.constant 0 : i32
    %47 = vector.broadcast %c0_i32 : i32 to vector<8x1xi32>
    %48 = arith.cmpi sgt, %21, %47 : vector<8x1xi32>
    %49 = vector.shape_cast %48 : vector<8x1xi1> to vector<8x1xi1>
    %50 = vector.broadcast %49 : vector<8x1xi1> to vector<8x16xi1>
    %51 = arith.select %50, %46, %23 : vector<8x16xi1>, vector<8x16xf32>
    %52 = vector.shape_cast %48 : vector<8x1xi1> to vector<8x1xi1>
    %53 = vector.broadcast %52 : vector<8x1xi1> to vector<8x16xi1>
    %54 = arith.select %53, %44, %24 : vector<8x16xi1>, vector<8x16xf32>
    %55 = vector.extract_strided_slice %20 {offsets = [8, 0], sizes = [8, 64], strides = [1, 1]} : vector<80x64xf32> to vector<8x64xf32>
    %56 = arith.truncf %51 : vector<8x16xf32> to vector<8x16xbf16>
    %cst_23 = arith.constant dense<0.000000e+00> : vector<8x64xf32>
    %57 = tpu.matmul %56, %22, %cst_23 {dimension_numbers = #tpu.dot_dimension_numbers<[1], [0], [0], [1], [0, 0, 1, 1], [], []>} : vector<8x16xbf16>, vector<16x64xbf16>, vector<8x64xf32> -> vector<8x64xf32>
    %58 = arith.addf %55, %57 : vector<8x64xf32>
    %59 = arith.negf %58 : vector<8x64xf32>
    %60 = math.exp %59 : vector<8x64xf32>
    %cst_24 = arith.constant 1.000000e+00 : f32
    %61 = vector.broadcast %cst_24 : f32 to vector<8x64xf32>
    %62 = arith.addf %61, %60 : vector<8x64xf32>
    %63 = arith.divf %61, %62 : vector<8x64xf32>
    %64 = vector.extract_strided_slice %63 {offsets = [0, 0], sizes = [8, 16], strides = [1, 1]} : vector<8x64xf32> to vector<8x16xf32>
    %65 = vector.extract_strided_slice %63 {offsets = [0, 16], sizes = [8, 16], strides = [1, 1]} : vector<8x64xf32> to vector<8x16xf32>
    %66 = vector.extract_strided_slice %63 {offsets = [0, 32], sizes = [8, 16], strides = [1, 1]} : vector<8x64xf32> to vector<8x16xf32>
    %cst_25 = arith.constant 2.000000e+00 : f32
    %67 = vector.broadcast %cst_25 : f32 to vector<8x16xf32>
    %68 = arith.mulf %67, %66 : vector<8x16xf32>
    %cst_26 = arith.constant 1.000000e+00 : f32
    %69 = vector.broadcast %cst_26 : f32 to vector<8x16xf32>
    %70 = arith.subf %68, %69 : vector<8x16xf32>
    %71 = vector.extract_strided_slice %63 {offsets = [0, 48], sizes = [8, 16], strides = [1, 1]} : vector<8x64xf32> to vector<8x16xf32>
    %72 = arith.mulf %65, %54 : vector<8x16xf32>
    %73 = arith.mulf %64, %70 : vector<8x16xf32>
    %74 = arith.addf %72, %73 : vector<8x16xf32>
    %75 = math.tanh %74 : vector<8x16xf32>
    %76 = arith.mulf %71, %75 : vector<8x16xf32>
    %c1_i32 = arith.constant 1 : i32
    %77 = vector.broadcast %c1_i32 : i32 to vector<8x1xi32>
    %78 = arith.cmpi sgt, %21, %77 : vector<8x1xi32>
    %79 = vector.shape_cast %78 : vector<8x1xi1> to vector<8x1xi1>
    %80 = vector.broadcast %79 : vector<8x1xi1> to vector<8x16xi1>
    %81 = arith.select %80, %76, %51 : vector<8x16xi1>, vector<8x16xf32>
    %82 = vector.shape_cast %78 : vector<8x1xi1> to vector<8x1xi1>
    %83 = vector.broadcast %82 : vector<8x1xi1> to vector<8x16xi1>
    %84 = arith.select %83, %74, %54 : vector<8x16xi1>, vector<8x16xf32>
    %85 = vector.extract_strided_slice %20 {offsets = [16, 0], sizes = [8, 64], strides = [1, 1]} : vector<80x64xf32> to vector<8x64xf32>
    %86 = arith.truncf %81 : vector<8x16xf32> to vector<8x16xbf16>
    %cst_27 = arith.constant dense<0.000000e+00> : vector<8x64xf32>
    %87 = tpu.matmul %86, %22, %cst_27 {dimension_numbers = #tpu.dot_dimension_numbers<[1], [0], [0], [1], [0, 0, 1, 1], [], []>} : vector<8x16xbf16>, vector<16x64xbf16>, vector<8x64xf32> -> vector<8x64xf32>
    %88 = arith.addf %85, %87 : vector<8x64xf32>
    %89 = arith.negf %88 : vector<8x64xf32>
    %90 = math.exp %89 : vector<8x64xf32>
    %cst_28 = arith.constant 1.000000e+00 : f32
    %91 = vector.broadcast %cst_28 : f32 to vector<8x64xf32>
    %92 = arith.addf %91, %90 : vector<8x64xf32>
    %93 = arith.divf %91, %92 : vector<8x64xf32>
    %94 = vector.extract_strided_slice %93 {offsets = [0, 0], sizes = [8, 16], strides = [1, 1]} : vector<8x64xf32> to vector<8x16xf32>
    %95 = vector.extract_strided_slice %93 {offsets = [0, 16], sizes = [8, 16], strides = [1, 1]} : vector<8x64xf32> to vector<8x16xf32>
    %96 = vector.extract_strided_slice %93 {offsets = [0, 32], sizes = [8, 16], strides = [1, 1]} : vector<8x64xf32> to vector<8x16xf32>
    %cst_29 = arith.constant 2.000000e+00 : f32
    %97 = vector.broadcast %cst_29 : f32 to vector<8x16xf32>
    %98 = arith.mulf %97, %96 : vector<8x16xf32>
    %cst_30 = arith.constant 1.000000e+00 : f32
    %99 = vector.broadcast %cst_30 : f32 to vector<8x16xf32>
    %100 = arith.subf %98, %99 : vector<8x16xf32>
    %101 = vector.extract_strided_slice %93 {offsets = [0, 48], sizes = [8, 16], strides = [1, 1]} : vector<8x64xf32> to vector<8x16xf32>
    %102 = arith.mulf %95, %84 : vector<8x16xf32>
    %103 = arith.mulf %94, %100 : vector<8x16xf32>
    %104 = arith.addf %102, %103 : vector<8x16xf32>
    %105 = math.tanh %104 : vector<8x16xf32>
    %106 = arith.mulf %101, %105 : vector<8x16xf32>
    %c2_i32 = arith.constant 2 : i32
    %107 = vector.broadcast %c2_i32 : i32 to vector<8x1xi32>
    %108 = arith.cmpi sgt, %21, %107 : vector<8x1xi32>
    %109 = vector.shape_cast %108 : vector<8x1xi1> to vector<8x1xi1>
    %110 = vector.broadcast %109 : vector<8x1xi1> to vector<8x16xi1>
    %111 = arith.select %110, %106, %81 : vector<8x16xi1>, vector<8x16xf32>
    %112 = vector.shape_cast %108 : vector<8x1xi1> to vector<8x1xi1>
    %113 = vector.broadcast %112 : vector<8x1xi1> to vector<8x16xi1>
    %114 = arith.select %113, %104, %84 : vector<8x16xi1>, vector<8x16xf32>
    %115 = vector.extract_strided_slice %20 {offsets = [24, 0], sizes = [8, 64], strides = [1, 1]} : vector<80x64xf32> to vector<8x64xf32>
    %116 = arith.truncf %111 : vector<8x16xf32> to vector<8x16xbf16>
    %cst_31 = arith.constant dense<0.000000e+00> : vector<8x64xf32>
    %117 = tpu.matmul %116, %22, %cst_31 {dimension_numbers = #tpu.dot_dimension_numbers<[1], [0], [0], [1], [0, 0, 1, 1], [], []>} : vector<8x16xbf16>, vector<16x64xbf16>, vector<8x64xf32> -> vector<8x64xf32>
    %118 = arith.addf %115, %117 : vector<8x64xf32>
    %119 = arith.negf %118 : vector<8x64xf32>
    %120 = math.exp %119 : vector<8x64xf32>
    %cst_32 = arith.constant 1.000000e+00 : f32
    %121 = vector.broadcast %cst_32 : f32 to vector<8x64xf32>
    %122 = arith.addf %121, %120 : vector<8x64xf32>
    %123 = arith.divf %121, %122 : vector<8x64xf32>
    %124 = vector.extract_strided_slice %123 {offsets = [0, 0], sizes = [8, 16], strides = [1, 1]} : vector<8x64xf32> to vector<8x16xf32>
    %125 = vector.extract_strided_slice %123 {offsets = [0, 16], sizes = [8, 16], strides = [1, 1]} : vector<8x64xf32> to vector<8x16xf32>
    %126 = vector.extract_strided_slice %123 {offsets = [0, 32], sizes = [8, 16], strides = [1, 1]} : vector<8x64xf32> to vector<8x16xf32>
    %cst_33 = arith.constant 2.000000e+00 : f32
    %127 = vector.broadcast %cst_33 : f32 to vector<8x16xf32>
    %128 = arith.mulf %127, %126 : vector<8x16xf32>
    %cst_34 = arith.constant 1.000000e+00 : f32
    %129 = vector.broadcast %cst_34 : f32 to vector<8x16xf32>
    %130 = arith.subf %128, %129 : vector<8x16xf32>
    %131 = vector.extract_strided_slice %123 {offsets = [0, 48], sizes = [8, 16], strides = [1, 1]} : vector<8x64xf32> to vector<8x16xf32>
    %132 = arith.mulf %125, %114 : vector<8x16xf32>
    %133 = arith.mulf %124, %130 : vector<8x16xf32>
    %134 = arith.addf %132, %133 : vector<8x16xf32>
    %135 = math.tanh %134 : vector<8x16xf32>
    %136 = arith.mulf %131, %135 : vector<8x16xf32>
    %c3_i32 = arith.constant 3 : i32
    %137 = vector.broadcast %c3_i32 : i32 to vector<8x1xi32>
    %138 = arith.cmpi sgt, %21, %137 : vector<8x1xi32>
    %139 = vector.shape_cast %138 : vector<8x1xi1> to vector<8x1xi1>
    %140 = vector.broadcast %139 : vector<8x1xi1> to vector<8x16xi1>
    %141 = arith.select %140, %136, %111 : vector<8x16xi1>, vector<8x16xf32>
    %142 = vector.shape_cast %138 : vector<8x1xi1> to vector<8x1xi1>
    %143 = vector.broadcast %142 : vector<8x1xi1> to vector<8x16xi1>
    %144 = arith.select %143, %134, %114 : vector<8x16xi1>, vector<8x16xf32>
    %145 = vector.extract_strided_slice %20 {offsets = [32, 0], sizes = [8, 64], strides = [1, 1]} : vector<80x64xf32> to vector<8x64xf32>
    %146 = arith.truncf %141 : vector<8x16xf32> to vector<8x16xbf16>
    %cst_35 = arith.constant dense<0.000000e+00> : vector<8x64xf32>
    %147 = tpu.matmul %146, %22, %cst_35 {dimension_numbers = #tpu.dot_dimension_numbers<[1], [0], [0], [1], [0, 0, 1, 1], [], []>} : vector<8x16xbf16>, vector<16x64xbf16>, vector<8x64xf32> -> vector<8x64xf32>
    %148 = arith.addf %145, %147 : vector<8x64xf32>
    %149 = arith.negf %148 : vector<8x64xf32>
    %150 = math.exp %149 : vector<8x64xf32>
    %cst_36 = arith.constant 1.000000e+00 : f32
    %151 = vector.broadcast %cst_36 : f32 to vector<8x64xf32>
    %152 = arith.addf %151, %150 : vector<8x64xf32>
    %153 = arith.divf %151, %152 : vector<8x64xf32>
    %154 = vector.extract_strided_slice %153 {offsets = [0, 0], sizes = [8, 16], strides = [1, 1]} : vector<8x64xf32> to vector<8x16xf32>
    %155 = vector.extract_strided_slice %153 {offsets = [0, 16], sizes = [8, 16], strides = [1, 1]} : vector<8x64xf32> to vector<8x16xf32>
    %156 = vector.extract_strided_slice %153 {offsets = [0, 32], sizes = [8, 16], strides = [1, 1]} : vector<8x64xf32> to vector<8x16xf32>
    %cst_37 = arith.constant 2.000000e+00 : f32
    %157 = vector.broadcast %cst_37 : f32 to vector<8x16xf32>
    %158 = arith.mulf %157, %156 : vector<8x16xf32>
    %cst_38 = arith.constant 1.000000e+00 : f32
    %159 = vector.broadcast %cst_38 : f32 to vector<8x16xf32>
    %160 = arith.subf %158, %159 : vector<8x16xf32>
    %161 = vector.extract_strided_slice %153 {offsets = [0, 48], sizes = [8, 16], strides = [1, 1]} : vector<8x64xf32> to vector<8x16xf32>
    %162 = arith.mulf %155, %144 : vector<8x16xf32>
    %163 = arith.mulf %154, %160 : vector<8x16xf32>
    %164 = arith.addf %162, %163 : vector<8x16xf32>
    %165 = math.tanh %164 : vector<8x16xf32>
    %166 = arith.mulf %161, %165 : vector<8x16xf32>
    %c4_i32 = arith.constant 4 : i32
    %167 = vector.broadcast %c4_i32 : i32 to vector<8x1xi32>
    %168 = arith.cmpi sgt, %21, %167 : vector<8x1xi32>
    %169 = vector.shape_cast %168 : vector<8x1xi1> to vector<8x1xi1>
    %170 = vector.broadcast %169 : vector<8x1xi1> to vector<8x16xi1>
    %171 = arith.select %170, %166, %141 : vector<8x16xi1>, vector<8x16xf32>
    %172 = vector.shape_cast %168 : vector<8x1xi1> to vector<8x1xi1>
    %173 = vector.broadcast %172 : vector<8x1xi1> to vector<8x16xi1>
    %174 = arith.select %173, %164, %144 : vector<8x16xi1>, vector<8x16xf32>
    %175 = vector.extract_strided_slice %20 {offsets = [40, 0], sizes = [8, 64], strides = [1, 1]} : vector<80x64xf32> to vector<8x64xf32>
    %176 = arith.truncf %171 : vector<8x16xf32> to vector<8x16xbf16>
    %cst_39 = arith.constant dense<0.000000e+00> : vector<8x64xf32>
    %177 = tpu.matmul %176, %22, %cst_39 {dimension_numbers = #tpu.dot_dimension_numbers<[1], [0], [0], [1], [0, 0, 1, 1], [], []>} : vector<8x16xbf16>, vector<16x64xbf16>, vector<8x64xf32> -> vector<8x64xf32>
    %178 = arith.addf %175, %177 : vector<8x64xf32>
    %179 = arith.negf %178 : vector<8x64xf32>
    %180 = math.exp %179 : vector<8x64xf32>
    %cst_40 = arith.constant 1.000000e+00 : f32
    %181 = vector.broadcast %cst_40 : f32 to vector<8x64xf32>
    %182 = arith.addf %181, %180 : vector<8x64xf32>
    %183 = arith.divf %181, %182 : vector<8x64xf32>
    %184 = vector.extract_strided_slice %183 {offsets = [0, 0], sizes = [8, 16], strides = [1, 1]} : vector<8x64xf32> to vector<8x16xf32>
    %185 = vector.extract_strided_slice %183 {offsets = [0, 16], sizes = [8, 16], strides = [1, 1]} : vector<8x64xf32> to vector<8x16xf32>
    %186 = vector.extract_strided_slice %183 {offsets = [0, 32], sizes = [8, 16], strides = [1, 1]} : vector<8x64xf32> to vector<8x16xf32>
    %cst_41 = arith.constant 2.000000e+00 : f32
    %187 = vector.broadcast %cst_41 : f32 to vector<8x16xf32>
    %188 = arith.mulf %187, %186 : vector<8x16xf32>
    %cst_42 = arith.constant 1.000000e+00 : f32
    %189 = vector.broadcast %cst_42 : f32 to vector<8x16xf32>
    %190 = arith.subf %188, %189 : vector<8x16xf32>
    %191 = vector.extract_strided_slice %183 {offsets = [0, 48], sizes = [8, 16], strides = [1, 1]} : vector<8x64xf32> to vector<8x16xf32>
    %192 = arith.mulf %185, %174 : vector<8x16xf32>
    %193 = arith.mulf %184, %190 : vector<8x16xf32>
    %194 = arith.addf %192, %193 : vector<8x16xf32>
    %195 = math.tanh %194 : vector<8x16xf32>
    %196 = arith.mulf %191, %195 : vector<8x16xf32>
    %c5_i32 = arith.constant 5 : i32
    %197 = vector.broadcast %c5_i32 : i32 to vector<8x1xi32>
    %198 = arith.cmpi sgt, %21, %197 : vector<8x1xi32>
    %199 = vector.shape_cast %198 : vector<8x1xi1> to vector<8x1xi1>
    %200 = vector.broadcast %199 : vector<8x1xi1> to vector<8x16xi1>
    %201 = arith.select %200, %196, %171 : vector<8x16xi1>, vector<8x16xf32>
    %202 = vector.shape_cast %198 : vector<8x1xi1> to vector<8x1xi1>
    %203 = vector.broadcast %202 : vector<8x1xi1> to vector<8x16xi1>
    %204 = arith.select %203, %194, %174 : vector<8x16xi1>, vector<8x16xf32>
    %205 = vector.extract_strided_slice %20 {offsets = [48, 0], sizes = [8, 64], strides = [1, 1]} : vector<80x64xf32> to vector<8x64xf32>
    %206 = arith.truncf %201 : vector<8x16xf32> to vector<8x16xbf16>
    %cst_43 = arith.constant dense<0.000000e+00> : vector<8x64xf32>
    %207 = tpu.matmul %206, %22, %cst_43 {dimension_numbers = #tpu.dot_dimension_numbers<[1], [0], [0], [1], [0, 0, 1, 1], [], []>} : vector<8x16xbf16>, vector<16x64xbf16>, vector<8x64xf32> -> vector<8x64xf32>
    %208 = arith.addf %205, %207 : vector<8x64xf32>
    %209 = arith.negf %208 : vector<8x64xf32>
    %210 = math.exp %209 : vector<8x64xf32>
    %cst_44 = arith.constant 1.000000e+00 : f32
    %211 = vector.broadcast %cst_44 : f32 to vector<8x64xf32>
    %212 = arith.addf %211, %210 : vector<8x64xf32>
    %213 = arith.divf %211, %212 : vector<8x64xf32>
    %214 = vector.extract_strided_slice %213 {offsets = [0, 0], sizes = [8, 16], strides = [1, 1]} : vector<8x64xf32> to vector<8x16xf32>
    %215 = vector.extract_strided_slice %213 {offsets = [0, 16], sizes = [8, 16], strides = [1, 1]} : vector<8x64xf32> to vector<8x16xf32>
    %216 = vector.extract_strided_slice %213 {offsets = [0, 32], sizes = [8, 16], strides = [1, 1]} : vector<8x64xf32> to vector<8x16xf32>
    %cst_45 = arith.constant 2.000000e+00 : f32
    %217 = vector.broadcast %cst_45 : f32 to vector<8x16xf32>
    %218 = arith.mulf %217, %216 : vector<8x16xf32>
    %cst_46 = arith.constant 1.000000e+00 : f32
    %219 = vector.broadcast %cst_46 : f32 to vector<8x16xf32>
    %220 = arith.subf %218, %219 : vector<8x16xf32>
    %221 = vector.extract_strided_slice %213 {offsets = [0, 48], sizes = [8, 16], strides = [1, 1]} : vector<8x64xf32> to vector<8x16xf32>
    %222 = arith.mulf %215, %204 : vector<8x16xf32>
    %223 = arith.mulf %214, %220 : vector<8x16xf32>
    %224 = arith.addf %222, %223 : vector<8x16xf32>
    %225 = math.tanh %224 : vector<8x16xf32>
    %226 = arith.mulf %221, %225 : vector<8x16xf32>
    %c6_i32 = arith.constant 6 : i32
    %227 = vector.broadcast %c6_i32 : i32 to vector<8x1xi32>
    %228 = arith.cmpi sgt, %21, %227 : vector<8x1xi32>
    %229 = vector.shape_cast %228 : vector<8x1xi1> to vector<8x1xi1>
    %230 = vector.broadcast %229 : vector<8x1xi1> to vector<8x16xi1>
    %231 = arith.select %230, %226, %201 : vector<8x16xi1>, vector<8x16xf32>
    %232 = vector.shape_cast %228 : vector<8x1xi1> to vector<8x1xi1>
    %233 = vector.broadcast %232 : vector<8x1xi1> to vector<8x16xi1>
    %234 = arith.select %233, %224, %204 : vector<8x16xi1>, vector<8x16xf32>
    %235 = vector.extract_strided_slice %20 {offsets = [56, 0], sizes = [8, 64], strides = [1, 1]} : vector<80x64xf32> to vector<8x64xf32>
    %236 = arith.truncf %231 : vector<8x16xf32> to vector<8x16xbf16>
    %cst_47 = arith.constant dense<0.000000e+00> : vector<8x64xf32>
    %237 = tpu.matmul %236, %22, %cst_47 {dimension_numbers = #tpu.dot_dimension_numbers<[1], [0], [0], [1], [0, 0, 1, 1], [], []>} : vector<8x16xbf16>, vector<16x64xbf16>, vector<8x64xf32> -> vector<8x64xf32>
    %238 = arith.addf %235, %237 : vector<8x64xf32>
    %239 = arith.negf %238 : vector<8x64xf32>
    %240 = math.exp %239 : vector<8x64xf32>
    %cst_48 = arith.constant 1.000000e+00 : f32
    %241 = vector.broadcast %cst_48 : f32 to vector<8x64xf32>
    %242 = arith.addf %241, %240 : vector<8x64xf32>
    %243 = arith.divf %241, %242 : vector<8x64xf32>
    %244 = vector.extract_strided_slice %243 {offsets = [0, 0], sizes = [8, 16], strides = [1, 1]} : vector<8x64xf32> to vector<8x16xf32>
    %245 = vector.extract_strided_slice %243 {offsets = [0, 16], sizes = [8, 16], strides = [1, 1]} : vector<8x64xf32> to vector<8x16xf32>
    %246 = vector.extract_strided_slice %243 {offsets = [0, 32], sizes = [8, 16], strides = [1, 1]} : vector<8x64xf32> to vector<8x16xf32>
    %cst_49 = arith.constant 2.000000e+00 : f32
    %247 = vector.broadcast %cst_49 : f32 to vector<8x16xf32>
    %248 = arith.mulf %247, %246 : vector<8x16xf32>
    %cst_50 = arith.constant 1.000000e+00 : f32
    %249 = vector.broadcast %cst_50 : f32 to vector<8x16xf32>
    %250 = arith.subf %248, %249 : vector<8x16xf32>
    %251 = vector.extract_strided_slice %243 {offsets = [0, 48], sizes = [8, 16], strides = [1, 1]} : vector<8x64xf32> to vector<8x16xf32>
    %252 = arith.mulf %245, %234 : vector<8x16xf32>
    %253 = arith.mulf %244, %250 : vector<8x16xf32>
    %254 = arith.addf %252, %253 : vector<8x16xf32>
    %255 = math.tanh %254 : vector<8x16xf32>
    %256 = arith.mulf %251, %255 : vector<8x16xf32>
    %c7_i32 = arith.constant 7 : i32
    %257 = vector.broadcast %c7_i32 : i32 to vector<8x1xi32>
    %258 = arith.cmpi sgt, %21, %257 : vector<8x1xi32>
    %259 = vector.shape_cast %258 : vector<8x1xi1> to vector<8x1xi1>
    %260 = vector.broadcast %259 : vector<8x1xi1> to vector<8x16xi1>
    %261 = arith.select %260, %256, %231 : vector<8x16xi1>, vector<8x16xf32>
    %262 = vector.shape_cast %258 : vector<8x1xi1> to vector<8x1xi1>
    %263 = vector.broadcast %262 : vector<8x1xi1> to vector<8x16xi1>
    %264 = arith.select %263, %254, %234 : vector<8x16xi1>, vector<8x16xf32>
    %265 = vector.extract_strided_slice %20 {offsets = [64, 0], sizes = [8, 64], strides = [1, 1]} : vector<80x64xf32> to vector<8x64xf32>
    %266 = arith.truncf %261 : vector<8x16xf32> to vector<8x16xbf16>
    %cst_51 = arith.constant dense<0.000000e+00> : vector<8x64xf32>
    %267 = tpu.matmul %266, %22, %cst_51 {dimension_numbers = #tpu.dot_dimension_numbers<[1], [0], [0], [1], [0, 0, 1, 1], [], []>} : vector<8x16xbf16>, vector<16x64xbf16>, vector<8x64xf32> -> vector<8x64xf32>
    %268 = arith.addf %265, %267 : vector<8x64xf32>
    %269 = arith.negf %268 : vector<8x64xf32>
    %270 = math.exp %269 : vector<8x64xf32>
    %cst_52 = arith.constant 1.000000e+00 : f32
    %271 = vector.broadcast %cst_52 : f32 to vector<8x64xf32>
    %272 = arith.addf %271, %270 : vector<8x64xf32>
    %273 = arith.divf %271, %272 : vector<8x64xf32>
    %274 = vector.extract_strided_slice %273 {offsets = [0, 0], sizes = [8, 16], strides = [1, 1]} : vector<8x64xf32> to vector<8x16xf32>
    %275 = vector.extract_strided_slice %273 {offsets = [0, 16], sizes = [8, 16], strides = [1, 1]} : vector<8x64xf32> to vector<8x16xf32>
    %276 = vector.extract_strided_slice %273 {offsets = [0, 32], sizes = [8, 16], strides = [1, 1]} : vector<8x64xf32> to vector<8x16xf32>
    %cst_53 = arith.constant 2.000000e+00 : f32
    %277 = vector.broadcast %cst_53 : f32 to vector<8x16xf32>
    %278 = arith.mulf %277, %276 : vector<8x16xf32>
    %cst_54 = arith.constant 1.000000e+00 : f32
    %279 = vector.broadcast %cst_54 : f32 to vector<8x16xf32>
    %280 = arith.subf %278, %279 : vector<8x16xf32>
    %281 = vector.extract_strided_slice %273 {offsets = [0, 48], sizes = [8, 16], strides = [1, 1]} : vector<8x64xf32> to vector<8x16xf32>
    %282 = arith.mulf %275, %264 : vector<8x16xf32>
    %283 = arith.mulf %274, %280 : vector<8x16xf32>
    %284 = arith.addf %282, %283 : vector<8x16xf32>
    %285 = math.tanh %284 : vector<8x16xf32>
    %286 = arith.mulf %281, %285 : vector<8x16xf32>
    %c8_i32 = arith.constant 8 : i32
    %287 = vector.broadcast %c8_i32 : i32 to vector<8x1xi32>
    %288 = arith.cmpi sgt, %21, %287 : vector<8x1xi32>
    %289 = vector.shape_cast %288 : vector<8x1xi1> to vector<8x1xi1>
    %290 = vector.broadcast %289 : vector<8x1xi1> to vector<8x16xi1>
    %291 = arith.select %290, %286, %261 : vector<8x16xi1>, vector<8x16xf32>
    %292 = vector.shape_cast %288 : vector<8x1xi1> to vector<8x1xi1>
    %293 = vector.broadcast %292 : vector<8x1xi1> to vector<8x16xi1>
    %294 = arith.select %293, %284, %264 : vector<8x16xi1>, vector<8x16xf32>
    %295 = vector.extract_strided_slice %20 {offsets = [72, 0], sizes = [8, 64], strides = [1, 1]} : vector<80x64xf32> to vector<8x64xf32>
    %296 = arith.truncf %291 : vector<8x16xf32> to vector<8x16xbf16>
    %cst_55 = arith.constant dense<0.000000e+00> : vector<8x64xf32>
    %297 = tpu.matmul %296, %22, %cst_55 {dimension_numbers = #tpu.dot_dimension_numbers<[1], [0], [0], [1], [0, 0, 1, 1], [], []>} : vector<8x16xbf16>, vector<16x64xbf16>, vector<8x64xf32> -> vector<8x64xf32>
    %298 = arith.addf %295, %297 : vector<8x64xf32>
    %299 = arith.negf %298 : vector<8x64xf32>
    %300 = math.exp %299 : vector<8x64xf32>
    %cst_56 = arith.constant 1.000000e+00 : f32
    %301 = vector.broadcast %cst_56 : f32 to vector<8x64xf32>
    %302 = arith.addf %301, %300 : vector<8x64xf32>
    %303 = arith.divf %301, %302 : vector<8x64xf32>
    %304 = vector.extract_strided_slice %303 {offsets = [0, 0], sizes = [8, 16], strides = [1, 1]} : vector<8x64xf32> to vector<8x16xf32>
    %305 = vector.extract_strided_slice %303 {offsets = [0, 16], sizes = [8, 16], strides = [1, 1]} : vector<8x64xf32> to vector<8x16xf32>
    %306 = vector.extract_strided_slice %303 {offsets = [0, 32], sizes = [8, 16], strides = [1, 1]} : vector<8x64xf32> to vector<8x16xf32>
    %cst_57 = arith.constant 2.000000e+00 : f32
    %307 = vector.broadcast %cst_57 : f32 to vector<8x16xf32>
    %308 = arith.mulf %307, %306 : vector<8x16xf32>
    %cst_58 = arith.constant 1.000000e+00 : f32
    %309 = vector.broadcast %cst_58 : f32 to vector<8x16xf32>
    %310 = arith.subf %308, %309 : vector<8x16xf32>
    %311 = vector.extract_strided_slice %303 {offsets = [0, 48], sizes = [8, 16], strides = [1, 1]} : vector<8x64xf32> to vector<8x16xf32>
    %312 = arith.mulf %305, %294 : vector<8x16xf32>
    %313 = arith.mulf %304, %310 : vector<8x16xf32>
    %314 = arith.addf %312, %313 : vector<8x16xf32>
    %315 = math.tanh %314 : vector<8x16xf32>
    %316 = arith.mulf %311, %315 : vector<8x16xf32>
    %c9_i32 = arith.constant 9 : i32
    %317 = vector.broadcast %c9_i32 : i32 to vector<8x1xi32>
    %318 = arith.cmpi sgt, %21, %317 : vector<8x1xi32>
    %319 = vector.shape_cast %318 : vector<8x1xi1> to vector<8x1xi1>
    %320 = vector.broadcast %319 : vector<8x1xi1> to vector<8x16xi1>
    %321 = arith.select %320, %316, %291 : vector<8x16xi1>, vector<8x16xf32>
    %c0_59 = arith.constant 0 : index
    %c0_60 = arith.constant 0 : index
    %322 = vector.load %arg8[%c0_59, %c0_60] : memref<16x128xf32, #tpu.memory_space<vmem>>, vector<16x128xf32>
    %cst_61 = arith.constant dense<0.000000e+00> : vector<8x128xf32>
    %323 = tpu.matmul %7, %322, %cst_61 {dimension_numbers = #tpu.dot_dimension_numbers<[1], [0], [0], [1], [0, 0, 1, 1], [], []>} : vector<8x16xf32>, vector<16x128xf32>, vector<8x128xf32> -> vector<8x128xf32>
    %c0_62 = arith.constant 0 : index
    %c0_63 = arith.constant 0 : index
    %324 = vector.load %arg9[%c0_62, %c0_63] : memref<16x128xf32, #tpu.memory_space<vmem>>, vector<16x128xf32>
    %cst_64 = arith.constant dense<0.000000e+00> : vector<8x128xf32>
    %325 = tpu.matmul %321, %324, %cst_64 {dimension_numbers = #tpu.dot_dimension_numbers<[1], [0], [0], [1], [0, 0, 1, 1], [], []>} : vector<8x16xf32>, vector<16x128xf32>, vector<8x128xf32> -> vector<8x128xf32>
    %326 = arith.addf %323, %325 : vector<8x128xf32>
    %c0_65 = arith.constant 0 : index
    %c0_66 = arith.constant 0 : index
    %327 = vector.load %arg11[%c0_65, %c0_66] : memref<1x128xf32, #tpu.memory_space<vmem>>, vector<1x128xf32>
    %328 = vector.broadcast %327 : vector<1x128xf32> to vector<8x128xf32>
    %329 = arith.addf %326, %328 : vector<8x128xf32>
    %c0_67 = arith.constant 0 : index
    %c0_68 = arith.constant 0 : index
    %330 = vector.load %arg10[%c0_67, %c0_68] : memref<32x128xbf16, #tpu.memory_space<vmem>>, vector<32x128xbf16>
    %cst_69 = arith.constant 0.000000e+00 : f32
    %331 = vector.broadcast %cst_69 : f32 to vector<1x32xf32>
    %cst_70 = arith.constant 0.000000e+00 : f32
    %332 = vector.broadcast %cst_70 : f32 to vector<1x32xf32>
    %333 = vector.extract_strided_slice %329 {offsets = [0, 0], sizes = [1, 128], strides = [1, 1]} : vector<8x128xf32> to vector<1x128xf32>
    %334 = arith.truncf %331 : vector<1x32xf32> to vector<1x32xbf16>
    %cst_71 = arith.constant dense<0.000000e+00> : vector<1x128xf32>
    %335 = tpu.matmul %334, %330, %cst_71 {dimension_numbers = #tpu.dot_dimension_numbers<[1], [0], [0], [1], [0, 0, 1, 1], [], []>} : vector<1x32xbf16>, vector<32x128xbf16>, vector<1x128xf32> -> vector<1x128xf32>
    %336 = arith.addf %333, %335 : vector<1x128xf32>
    %337 = arith.negf %336 : vector<1x128xf32>
    %338 = math.exp %337 : vector<1x128xf32>
    %cst_72 = arith.constant 1.000000e+00 : f32
    %339 = vector.broadcast %cst_72 : f32 to vector<1x128xf32>
    %340 = arith.addf %339, %338 : vector<1x128xf32>
    %341 = arith.divf %339, %340 : vector<1x128xf32>
    %342 = vector.extract_strided_slice %341 {offsets = [0, 0], sizes = [1, 32], strides = [1, 1]} : vector<1x128xf32> to vector<1x32xf32>
    %343 = vector.extract_strided_slice %341 {offsets = [0, 32], sizes = [1, 32], strides = [1, 1]} : vector<1x128xf32> to vector<1x32xf32>
    %344 = vector.extract_strided_slice %341 {offsets = [0, 64], sizes = [1, 32], strides = [1, 1]} : vector<1x128xf32> to vector<1x32xf32>
    %cst_73 = arith.constant 2.000000e+00 : f32
    %345 = vector.broadcast %cst_73 : f32 to vector<1x32xf32>
    %346 = arith.mulf %345, %344 : vector<1x32xf32>
    %cst_74 = arith.constant 1.000000e+00 : f32
    %347 = vector.broadcast %cst_74 : f32 to vector<1x32xf32>
    %348 = arith.subf %346, %347 : vector<1x32xf32>
    %349 = vector.extract_strided_slice %341 {offsets = [0, 96], sizes = [1, 32], strides = [1, 1]} : vector<1x128xf32> to vector<1x32xf32>
    %350 = arith.mulf %343, %332 : vector<1x32xf32>
    %351 = arith.mulf %342, %348 : vector<1x32xf32>
    %352 = arith.addf %350, %351 : vector<1x32xf32>
    %353 = math.tanh %352 : vector<1x32xf32>
    %354 = arith.mulf %349, %353 : vector<1x32xf32>
    %355 = vector.extract_strided_slice %329 {offsets = [1, 0], sizes = [1, 128], strides = [1, 1]} : vector<8x128xf32> to vector<1x128xf32>
    %356 = arith.truncf %354 : vector<1x32xf32> to vector<1x32xbf16>
    %cst_75 = arith.constant dense<0.000000e+00> : vector<1x128xf32>
    %357 = tpu.matmul %356, %330, %cst_75 {dimension_numbers = #tpu.dot_dimension_numbers<[1], [0], [0], [1], [0, 0, 1, 1], [], []>} : vector<1x32xbf16>, vector<32x128xbf16>, vector<1x128xf32> -> vector<1x128xf32>
    %358 = arith.addf %355, %357 : vector<1x128xf32>
    %359 = arith.negf %358 : vector<1x128xf32>
    %360 = math.exp %359 : vector<1x128xf32>
    %cst_76 = arith.constant 1.000000e+00 : f32
    %361 = vector.broadcast %cst_76 : f32 to vector<1x128xf32>
    %362 = arith.addf %361, %360 : vector<1x128xf32>
    %363 = arith.divf %361, %362 : vector<1x128xf32>
    %364 = vector.extract_strided_slice %363 {offsets = [0, 0], sizes = [1, 32], strides = [1, 1]} : vector<1x128xf32> to vector<1x32xf32>
    %365 = vector.extract_strided_slice %363 {offsets = [0, 32], sizes = [1, 32], strides = [1, 1]} : vector<1x128xf32> to vector<1x32xf32>
    %366 = vector.extract_strided_slice %363 {offsets = [0, 64], sizes = [1, 32], strides = [1, 1]} : vector<1x128xf32> to vector<1x32xf32>
    %cst_77 = arith.constant 2.000000e+00 : f32
    %367 = vector.broadcast %cst_77 : f32 to vector<1x32xf32>
    %368 = arith.mulf %367, %366 : vector<1x32xf32>
    %cst_78 = arith.constant 1.000000e+00 : f32
    %369 = vector.broadcast %cst_78 : f32 to vector<1x32xf32>
    %370 = arith.subf %368, %369 : vector<1x32xf32>
    %371 = vector.extract_strided_slice %363 {offsets = [0, 96], sizes = [1, 32], strides = [1, 1]} : vector<1x128xf32> to vector<1x32xf32>
    %372 = arith.mulf %365, %352 : vector<1x32xf32>
    %373 = arith.mulf %364, %370 : vector<1x32xf32>
    %374 = arith.addf %372, %373 : vector<1x32xf32>
    %375 = math.tanh %374 : vector<1x32xf32>
    %376 = arith.mulf %371, %375 : vector<1x32xf32>
    %377 = vector.extract_strided_slice %329 {offsets = [2, 0], sizes = [1, 128], strides = [1, 1]} : vector<8x128xf32> to vector<1x128xf32>
    %378 = arith.truncf %376 : vector<1x32xf32> to vector<1x32xbf16>
    %cst_79 = arith.constant dense<0.000000e+00> : vector<1x128xf32>
    %379 = tpu.matmul %378, %330, %cst_79 {dimension_numbers = #tpu.dot_dimension_numbers<[1], [0], [0], [1], [0, 0, 1, 1], [], []>} : vector<1x32xbf16>, vector<32x128xbf16>, vector<1x128xf32> -> vector<1x128xf32>
    %380 = arith.addf %377, %379 : vector<1x128xf32>
    %381 = arith.negf %380 : vector<1x128xf32>
    %382 = math.exp %381 : vector<1x128xf32>
    %cst_80 = arith.constant 1.000000e+00 : f32
    %383 = vector.broadcast %cst_80 : f32 to vector<1x128xf32>
    %384 = arith.addf %383, %382 : vector<1x128xf32>
    %385 = arith.divf %383, %384 : vector<1x128xf32>
    %386 = vector.extract_strided_slice %385 {offsets = [0, 0], sizes = [1, 32], strides = [1, 1]} : vector<1x128xf32> to vector<1x32xf32>
    %387 = vector.extract_strided_slice %385 {offsets = [0, 32], sizes = [1, 32], strides = [1, 1]} : vector<1x128xf32> to vector<1x32xf32>
    %388 = vector.extract_strided_slice %385 {offsets = [0, 64], sizes = [1, 32], strides = [1, 1]} : vector<1x128xf32> to vector<1x32xf32>
    %cst_81 = arith.constant 2.000000e+00 : f32
    %389 = vector.broadcast %cst_81 : f32 to vector<1x32xf32>
    %390 = arith.mulf %389, %388 : vector<1x32xf32>
    %cst_82 = arith.constant 1.000000e+00 : f32
    %391 = vector.broadcast %cst_82 : f32 to vector<1x32xf32>
    %392 = arith.subf %390, %391 : vector<1x32xf32>
    %393 = vector.extract_strided_slice %385 {offsets = [0, 96], sizes = [1, 32], strides = [1, 1]} : vector<1x128xf32> to vector<1x32xf32>
    %394 = arith.mulf %387, %374 : vector<1x32xf32>
    %395 = arith.mulf %386, %392 : vector<1x32xf32>
    %396 = arith.addf %394, %395 : vector<1x32xf32>
    %397 = math.tanh %396 : vector<1x32xf32>
    %398 = arith.mulf %393, %397 : vector<1x32xf32>
    %399 = vector.extract_strided_slice %329 {offsets = [3, 0], sizes = [1, 128], strides = [1, 1]} : vector<8x128xf32> to vector<1x128xf32>
    %400 = arith.truncf %398 : vector<1x32xf32> to vector<1x32xbf16>
    %cst_83 = arith.constant dense<0.000000e+00> : vector<1x128xf32>
    %401 = tpu.matmul %400, %330, %cst_83 {dimension_numbers = #tpu.dot_dimension_numbers<[1], [0], [0], [1], [0, 0, 1, 1], [], []>} : vector<1x32xbf16>, vector<32x128xbf16>, vector<1x128xf32> -> vector<1x128xf32>
    %402 = arith.addf %399, %401 : vector<1x128xf32>
    %403 = arith.negf %402 : vector<1x128xf32>
    %404 = math.exp %403 : vector<1x128xf32>
    %cst_84 = arith.constant 1.000000e+00 : f32
    %405 = vector.broadcast %cst_84 : f32 to vector<1x128xf32>
    %406 = arith.addf %405, %404 : vector<1x128xf32>
    %407 = arith.divf %405, %406 : vector<1x128xf32>
    %408 = vector.extract_strided_slice %407 {offsets = [0, 0], sizes = [1, 32], strides = [1, 1]} : vector<1x128xf32> to vector<1x32xf32>
    %409 = vector.extract_strided_slice %407 {offsets = [0, 32], sizes = [1, 32], strides = [1, 1]} : vector<1x128xf32> to vector<1x32xf32>
    %410 = vector.extract_strided_slice %407 {offsets = [0, 64], sizes = [1, 32], strides = [1, 1]} : vector<1x128xf32> to vector<1x32xf32>
    %cst_85 = arith.constant 2.000000e+00 : f32
    %411 = vector.broadcast %cst_85 : f32 to vector<1x32xf32>
    %412 = arith.mulf %411, %410 : vector<1x32xf32>
    %cst_86 = arith.constant 1.000000e+00 : f32
    %413 = vector.broadcast %cst_86 : f32 to vector<1x32xf32>
    %414 = arith.subf %412, %413 : vector<1x32xf32>
    %415 = vector.extract_strided_slice %407 {offsets = [0, 96], sizes = [1, 32], strides = [1, 1]} : vector<1x128xf32> to vector<1x32xf32>
    %416 = arith.mulf %409, %396 : vector<1x32xf32>
    %417 = arith.mulf %408, %414 : vector<1x32xf32>
    %418 = arith.addf %416, %417 : vector<1x32xf32>
    %419 = math.tanh %418 : vector<1x32xf32>
    %420 = arith.mulf %415, %419 : vector<1x32xf32>
    %421 = vector.extract_strided_slice %329 {offsets = [4, 0], sizes = [1, 128], strides = [1, 1]} : vector<8x128xf32> to vector<1x128xf32>
    %422 = arith.truncf %420 : vector<1x32xf32> to vector<1x32xbf16>
    %cst_87 = arith.constant dense<0.000000e+00> : vector<1x128xf32>
    %423 = tpu.matmul %422, %330, %cst_87 {dimension_numbers = #tpu.dot_dimension_numbers<[1], [0], [0], [1], [0, 0, 1, 1], [], []>} : vector<1x32xbf16>, vector<32x128xbf16>, vector<1x128xf32> -> vector<1x128xf32>
    %424 = arith.addf %421, %423 : vector<1x128xf32>
    %425 = arith.negf %424 : vector<1x128xf32>
    %426 = math.exp %425 : vector<1x128xf32>
    %cst_88 = arith.constant 1.000000e+00 : f32
    %427 = vector.broadcast %cst_88 : f32 to vector<1x128xf32>
    %428 = arith.addf %427, %426 : vector<1x128xf32>
    %429 = arith.divf %427, %428 : vector<1x128xf32>
    %430 = vector.extract_strided_slice %429 {offsets = [0, 0], sizes = [1, 32], strides = [1, 1]} : vector<1x128xf32> to vector<1x32xf32>
    %431 = vector.extract_strided_slice %429 {offsets = [0, 32], sizes = [1, 32], strides = [1, 1]} : vector<1x128xf32> to vector<1x32xf32>
    %432 = vector.extract_strided_slice %429 {offsets = [0, 64], sizes = [1, 32], strides = [1, 1]} : vector<1x128xf32> to vector<1x32xf32>
    %cst_89 = arith.constant 2.000000e+00 : f32
    %433 = vector.broadcast %cst_89 : f32 to vector<1x32xf32>
    %434 = arith.mulf %433, %432 : vector<1x32xf32>
    %cst_90 = arith.constant 1.000000e+00 : f32
    %435 = vector.broadcast %cst_90 : f32 to vector<1x32xf32>
    %436 = arith.subf %434, %435 : vector<1x32xf32>
    %437 = vector.extract_strided_slice %429 {offsets = [0, 96], sizes = [1, 32], strides = [1, 1]} : vector<1x128xf32> to vector<1x32xf32>
    %438 = arith.mulf %431, %418 : vector<1x32xf32>
    %439 = arith.mulf %430, %436 : vector<1x32xf32>
    %440 = arith.addf %438, %439 : vector<1x32xf32>
    %441 = math.tanh %440 : vector<1x32xf32>
    %442 = arith.mulf %437, %441 : vector<1x32xf32>
    %443 = vector.extract_strided_slice %329 {offsets = [5, 0], sizes = [1, 128], strides = [1, 1]} : vector<8x128xf32> to vector<1x128xf32>
    %444 = arith.truncf %442 : vector<1x32xf32> to vector<1x32xbf16>
    %cst_91 = arith.constant dense<0.000000e+00> : vector<1x128xf32>
    %445 = tpu.matmul %444, %330, %cst_91 {dimension_numbers = #tpu.dot_dimension_numbers<[1], [0], [0], [1], [0, 0, 1, 1], [], []>} : vector<1x32xbf16>, vector<32x128xbf16>, vector<1x128xf32> -> vector<1x128xf32>
    %446 = arith.addf %443, %445 : vector<1x128xf32>
    %447 = arith.negf %446 : vector<1x128xf32>
    %448 = math.exp %447 : vector<1x128xf32>
    %cst_92 = arith.constant 1.000000e+00 : f32
    %449 = vector.broadcast %cst_92 : f32 to vector<1x128xf32>
    %450 = arith.addf %449, %448 : vector<1x128xf32>
    %451 = arith.divf %449, %450 : vector<1x128xf32>
    %452 = vector.extract_strided_slice %451 {offsets = [0, 0], sizes = [1, 32], strides = [1, 1]} : vector<1x128xf32> to vector<1x32xf32>
    %453 = vector.extract_strided_slice %451 {offsets = [0, 32], sizes = [1, 32], strides = [1, 1]} : vector<1x128xf32> to vector<1x32xf32>
    %454 = vector.extract_strided_slice %451 {offsets = [0, 64], sizes = [1, 32], strides = [1, 1]} : vector<1x128xf32> to vector<1x32xf32>
    %cst_93 = arith.constant 2.000000e+00 : f32
    %455 = vector.broadcast %cst_93 : f32 to vector<1x32xf32>
    %456 = arith.mulf %455, %454 : vector<1x32xf32>
    %cst_94 = arith.constant 1.000000e+00 : f32
    %457 = vector.broadcast %cst_94 : f32 to vector<1x32xf32>
    %458 = arith.subf %456, %457 : vector<1x32xf32>
    %459 = vector.extract_strided_slice %451 {offsets = [0, 96], sizes = [1, 32], strides = [1, 1]} : vector<1x128xf32> to vector<1x32xf32>
    %460 = arith.mulf %453, %440 : vector<1x32xf32>
    %461 = arith.mulf %452, %458 : vector<1x32xf32>
    %462 = arith.addf %460, %461 : vector<1x32xf32>
    %463 = math.tanh %462 : vector<1x32xf32>
    %464 = arith.mulf %459, %463 : vector<1x32xf32>
    %465 = vector.extract_strided_slice %329 {offsets = [6, 0], sizes = [1, 128], strides = [1, 1]} : vector<8x128xf32> to vector<1x128xf32>
    %466 = arith.truncf %464 : vector<1x32xf32> to vector<1x32xbf16>
    %cst_95 = arith.constant dense<0.000000e+00> : vector<1x128xf32>
    %467 = tpu.matmul %466, %330, %cst_95 {dimension_numbers = #tpu.dot_dimension_numbers<[1], [0], [0], [1], [0, 0, 1, 1], [], []>} : vector<1x32xbf16>, vector<32x128xbf16>, vector<1x128xf32> -> vector<1x128xf32>
    %468 = arith.addf %465, %467 : vector<1x128xf32>
    %469 = arith.negf %468 : vector<1x128xf32>
    %470 = math.exp %469 : vector<1x128xf32>
    %cst_96 = arith.constant 1.000000e+00 : f32
    %471 = vector.broadcast %cst_96 : f32 to vector<1x128xf32>
    %472 = arith.addf %471, %470 : vector<1x128xf32>
    %473 = arith.divf %471, %472 : vector<1x128xf32>
    %474 = vector.extract_strided_slice %473 {offsets = [0, 0], sizes = [1, 32], strides = [1, 1]} : vector<1x128xf32> to vector<1x32xf32>
    %475 = vector.extract_strided_slice %473 {offsets = [0, 32], sizes = [1, 32], strides = [1, 1]} : vector<1x128xf32> to vector<1x32xf32>
    %476 = vector.extract_strided_slice %473 {offsets = [0, 64], sizes = [1, 32], strides = [1, 1]} : vector<1x128xf32> to vector<1x32xf32>
    %cst_97 = arith.constant 2.000000e+00 : f32
    %477 = vector.broadcast %cst_97 : f32 to vector<1x32xf32>
    %478 = arith.mulf %477, %476 : vector<1x32xf32>
    %cst_98 = arith.constant 1.000000e+00 : f32
    %479 = vector.broadcast %cst_98 : f32 to vector<1x32xf32>
    %480 = arith.subf %478, %479 : vector<1x32xf32>
    %481 = vector.extract_strided_slice %473 {offsets = [0, 96], sizes = [1, 32], strides = [1, 1]} : vector<1x128xf32> to vector<1x32xf32>
    %482 = arith.mulf %475, %462 : vector<1x32xf32>
    %483 = arith.mulf %474, %480 : vector<1x32xf32>
    %484 = arith.addf %482, %483 : vector<1x32xf32>
    %485 = math.tanh %484 : vector<1x32xf32>
    %486 = arith.mulf %481, %485 : vector<1x32xf32>
    %487 = vector.extract_strided_slice %329 {offsets = [7, 0], sizes = [1, 128], strides = [1, 1]} : vector<8x128xf32> to vector<1x128xf32>
    %488 = arith.truncf %486 : vector<1x32xf32> to vector<1x32xbf16>
    %cst_99 = arith.constant dense<0.000000e+00> : vector<1x128xf32>
    %489 = tpu.matmul %488, %330, %cst_99 {dimension_numbers = #tpu.dot_dimension_numbers<[1], [0], [0], [1], [0, 0, 1, 1], [], []>} : vector<1x32xbf16>, vector<32x128xbf16>, vector<1x128xf32> -> vector<1x128xf32>
    %490 = arith.addf %487, %489 : vector<1x128xf32>
    %491 = arith.negf %490 : vector<1x128xf32>
    %492 = math.exp %491 : vector<1x128xf32>
    %cst_100 = arith.constant 1.000000e+00 : f32
    %493 = vector.broadcast %cst_100 : f32 to vector<1x128xf32>
    %494 = arith.addf %493, %492 : vector<1x128xf32>
    %495 = arith.divf %493, %494 : vector<1x128xf32>
    %496 = vector.extract_strided_slice %495 {offsets = [0, 0], sizes = [1, 32], strides = [1, 1]} : vector<1x128xf32> to vector<1x32xf32>
    %497 = vector.extract_strided_slice %495 {offsets = [0, 32], sizes = [1, 32], strides = [1, 1]} : vector<1x128xf32> to vector<1x32xf32>
    %498 = vector.extract_strided_slice %495 {offsets = [0, 64], sizes = [1, 32], strides = [1, 1]} : vector<1x128xf32> to vector<1x32xf32>
    %cst_101 = arith.constant 2.000000e+00 : f32
    %499 = vector.broadcast %cst_101 : f32 to vector<1x32xf32>
    %500 = arith.mulf %499, %498 : vector<1x32xf32>
    %cst_102 = arith.constant 1.000000e+00 : f32
    %501 = vector.broadcast %cst_102 : f32 to vector<1x32xf32>
    %502 = arith.subf %500, %501 : vector<1x32xf32>
    %503 = vector.extract_strided_slice %495 {offsets = [0, 96], sizes = [1, 32], strides = [1, 1]} : vector<1x128xf32> to vector<1x32xf32>
    %504 = arith.mulf %497, %484 : vector<1x32xf32>
    %505 = arith.mulf %496, %502 : vector<1x32xf32>
    %506 = arith.addf %504, %505 : vector<1x32xf32>
    %507 = math.tanh %506 : vector<1x32xf32>
    %508 = arith.mulf %503, %507 : vector<1x32xf32>
    %509 = tpu.concatenate %354, %376, %398, %420, %442, %464, %486, %508 in 0 : vector<1x32xf32>, vector<1x32xf32>, vector<1x32xf32>, vector<1x32xf32>, vector<1x32xf32>, vector<1x32xf32>, vector<1x32xf32>, vector<1x32xf32> -> vector<8x32xf32>
    %c0_103 = arith.constant 0 : index
    %c0_104 = arith.constant 0 : index
    %510 = vector.load %arg12[%c0_103, %c0_104] : memref<32x128xf32, #tpu.memory_space<vmem>>, vector<32x128xf32>
    %cst_105 = arith.constant dense<0.000000e+00> : vector<8x128xf32>
    %511 = tpu.matmul %509, %510, %cst_105 {dimension_numbers = #tpu.dot_dimension_numbers<[1], [0], [0], [1], [0, 0, 1, 1], [], []>} : vector<8x32xf32>, vector<32x128xf32>, vector<8x128xf32> -> vector<8x128xf32>
    %c0_106 = arith.constant 0 : index
    %c0_107 = arith.constant 0 : index
    %512 = vector.load %arg13[%c0_106, %c0_107] : memref<1x128xf32, #tpu.memory_space<vmem>>, vector<1x128xf32>
    %513 = vector.broadcast %512 : vector<1x128xf32> to vector<8x128xf32>
    %514 = arith.addf %511, %513 : vector<8x128xf32>
    %cst_108 = arith.constant dense<0xFF800000> : vector<8xf32>
    %515 = vector.multi_reduction <maximumf>, %514, %cst_108 [1] : vector<8x128xf32> to vector<8xf32>
    %516 = vector.shape_cast %515 : vector<8xf32> to vector<8x1xf32>
    %517 = vector.broadcast %516 : vector<8x1xf32> to vector<8x128xf32>
    %518 = arith.subf %514, %517 : vector<8x128xf32>
    %519 = math.exp %518 : vector<8x128xf32>
    %cst_109 = arith.constant dense<0.000000e+00> : vector<8xf32>
    %520 = vector.multi_reduction <add>, %519, %cst_109 [1] : vector<8x128xf32> to vector<8xf32>
    %521 = vector.shape_cast %520 : vector<8xf32> to vector<8x1xf32>
    %522 = math.log %521 : vector<8x1xf32>
    %523 = vector.broadcast %522 : vector<8x1xf32> to vector<8x128xf32>
    %524 = arith.subf %518, %523 : vector<8x128xf32>
    %c0_110 = arith.constant 0 : index
    %c0_111 = arith.constant 0 : index
    %525 = vector.load %arg14[%c0_110, %c0_111] : memref<8x128xf32, #tpu.memory_space<vmem>>, vector<8x128xf32>
    tpu.vector_store %arg14[%c0_110, %c0_111], %524 {strides = array<i32>} : memref<8x128xf32, #tpu.memory_space<vmem>>, vector<8x128xf32>,
    return
  }
}

</mosaic_0001>

<llo_original>
// kernel: tpu_custom_call.1
$region0: #{tpu_custom_call.1}
  #allocation0 [shape = 'u32[]', space=smem, size = 0x4, offset = 0x4, fixed_abs, tag = 'smem constant byte address 0x4 - core index']
  #allocation1 [shape = 'u32[144,128]{1,0:T(1,128)}', space=vmem, size = 0x12000, scoped, tag = 'internal scratch']
  %s0 = inlined_call_operand.vmem [shape: s32[8,1], index: 0, kind: input, shape index: {}]
  %s1 = inlined_call_operand.vmem [shape: s32[80,1], index: 1, kind: input, shape index: {}]
  %s2 = inlined_call_operand.vmem [shape: s32[8,1], index: 2, kind: input, shape index: {}]
  %s3 = inlined_call_operand.vmem [shape: f32[40,16], index: 3, kind: input, shape index: {}]
  %s4 = inlined_call_operand.vmem [shape: f32[26,8], index: 4, kind: input, shape index: {}]
  %s5 = inlined_call_operand.vmem [shape: f32[8,64], index: 5, kind: input, shape index: {}]
  %s6 = inlined_call_operand.vmem [shape: bf16[16,64], index: 6, kind: input, shape index: {}]
  %s7 = inlined_call_operand.vmem [shape: f32[1,64], index: 7, kind: input, shape index: {}]
  %s8 = inlined_call_operand.vmem [shape: f32[16,128], index: 8, kind: input, shape index: {}]
  %s9 = inlined_call_operand.vmem [shape: f32[16,128], index: 9, kind: input, shape index: {}]
  %s10 = inlined_call_operand.vmem [shape: bf16[32,128], index: 10, kind: input, shape index: {}]
  %s11 = inlined_call_operand.vmem [shape: f32[1,128], index: 11, kind: input, shape index: {}]
  %s12 = inlined_call_operand.vmem [shape: f32[32,128], index: 12, kind: input, shape index: {}]
  %s13 = inlined_call_operand.vmem [shape: f32[1,128], index: 13, kind: input, shape index: {}]
  %s14 = inlined_call_operand.hbm [shape: f32[8,128], index: 14, kind: output, shape index: {}]
  %s15 = sld [smem:[#allocation0]]
  $region66: #{tpu_custom_call.1} parent=0
    _
  %s17 = ssub.s32 1, %s15
  %s18 = scalar_select 0, %s17, %s15
  $region1: #{tpu_custom_call.1} parent=0
    #allocation2 [shape = 'u8[4096]{0}', space=vmem, size = 0x1000, scoped, tag = 'output window, operand 0, single buffered']
    #allocation3 [shape = 's32[1]{0}', space=sflag, size = 0x4, scoped, tag = 'scoped memory for tpu_custom_call.1']
    %19 = vsyncpa [#allocation3], 0
    // Predicated region
    $region2: #{tpu_custom_call.1} parent=1 // pred_check
      _
    $region3: #{tpu_custom_call.1} parent=1 // pred_check_branch
      %21 = sbr.rel (0) target = $region5
    $region4: #{tpu_custom_call.1} parent=1 // pred_region
      _
    $region5: #{tpu_custom_call.1} parent=1 // pred_fallthru
      _
    // Predicated region
    $region6: #{tpu_custom_call.1} parent=1 // pred_check
      _
    $region7: #{tpu_custom_call.1} parent=1 // pred_check_branch
      %23 = sbr.rel (0) target = $region9
    $region8: #{tpu_custom_call.1} parent=1 // pred_region
      _
    $region9: #{tpu_custom_call.1} parent=1 // pred_fallthru
      _
    // Predicated region
    $region10: #{tpu_custom_call.1} parent=1 // pred_check
      _
    $region11: #{tpu_custom_call.1} parent=1 // pred_check_branch
      %25 = sbr.rel (0) target = $region13
    $region12: #{tpu_custom_call.1} parent=1 // pred_region
      _
    $region13: #{tpu_custom_call.1} parent=1 // pred_fallthru
      _
    // Predicated region
    $region14: #{tpu_custom_call.1} parent=1 // pred_check
      _
    $region15: #{tpu_custom_call.1} parent=1 // pred_check_branch
      %27 = sbr.rel (0) target = $region17
    $region16: #{tpu_custom_call.1} parent=1 // pred_region
      _
    $region17: #{tpu_custom_call.1} parent=1 // pred_fallthru
      _
    // Predicated region
    $region18: #{tpu_custom_call.1} parent=1 // pred_check
      _
    $region19: #{tpu_custom_call.1} parent=1 // pred_check_branch
      %29 = sbr.rel (0) target = $region21
    $region20: #{tpu_custom_call.1} parent=1 // pred_region
      _
    $region21: #{tpu_custom_call.1} parent=1 // pred_fallthru
      _
    // Predicated region
    $region22: #{tpu_custom_call.1} parent=1 // pred_check
      _
    $region23: #{tpu_custom_call.1} parent=1 // pred_check_branch
      %31 = sbr.rel (0) target = $region25
    $region24: #{tpu_custom_call.1} parent=1 // pred_region
      _
    $region25: #{tpu_custom_call.1} parent=1 // pred_fallthru
      _
    // Predicated region
    $region26: #{tpu_custom_call.1} parent=1 // pred_check
      _
    $region27: #{tpu_custom_call.1} parent=1 // pred_check_branch
      %33 = sbr.rel (0) target = $region29
    $region28: #{tpu_custom_call.1} parent=1 // pred_region
      _
    $region29: #{tpu_custom_call.1} parent=1 // pred_fallthru
      _
    // Predicated region
    $region30: #{tpu_custom_call.1} parent=1 // pred_check
      _
    $region31: #{tpu_custom_call.1} parent=1 // pred_check_branch
      %35 = sbr.rel (0) target = $region33
    $region32: #{tpu_custom_call.1} parent=1 // pred_region
      _
    $region33: #{tpu_custom_call.1} parent=1 // pred_fallthru
      _
    // Predicated region
    $region34: #{tpu_custom_call.1} parent=1 // pred_check
      _
    $region35: #{tpu_custom_call.1} parent=1 // pred_check_branch
      %37 = sbr.rel (0) target = $region37
    $region36: #{tpu_custom_call.1} parent=1 // pred_region
      _
    $region37: #{tpu_custom_call.1} parent=1 // pred_fallthru
      _
    // Predicated region
    $region38: #{tpu_custom_call.1} parent=1 // pred_check
      _
    $region39: #{tpu_custom_call.1} parent=1 // pred_check_branch
      %39 = sbr.rel (0) target = $region41
    $region40: #{tpu_custom_call.1} parent=1 // pred_region
      _
    $region41: #{tpu_custom_call.1} parent=1 // pred_fallthru
      _
    // Predicated region
    $region42: #{tpu_custom_call.1} parent=1 // pred_check
      _
    $region43: #{tpu_custom_call.1} parent=1 // pred_check_branch
      %41 = sbr.rel (0) target = $region45
    $region44: #{tpu_custom_call.1} parent=1 // pred_region
      _
    $region45: #{tpu_custom_call.1} parent=1 // pred_fallthru
      _
    // Predicated region
    $region46: #{tpu_custom_call.1} parent=1 // pred_check
      _
    $region47: #{tpu_custom_call.1} parent=1 // pred_check_branch
      %43 = sbr.rel (0) target = $region49
    $region48: #{tpu_custom_call.1} parent=1 // pred_region
      _
    $region49: #{tpu_custom_call.1} parent=1 // pred_fallthru
      _
    // Predicated region
    $region50: #{tpu_custom_call.1} parent=1 // pred_check
      _
    $region51: #{tpu_custom_call.1} parent=1 // pred_check_branch
      %45 = sbr.rel (0) target = $region53
    $region52: #{tpu_custom_call.1} parent=1 // pred_region
      _
    $region53: #{tpu_custom_call.1} parent=1 // pred_fallthru
      _
    // Predicated region
    $region54: #{tpu_custom_call.1} parent=1 // pred_check
      _
    $region55: #{tpu_custom_call.1} parent=1 // pred_check_branch
      %47 = sbr.rel (0) target = $region57
    $region56: #{tpu_custom_call.1} parent=1 // pred_region
      _
    $region57: #{tpu_custom_call.1} parent=1 // pred_fallthru
      _
    %v49 = vld [vmem:[%s0] sm:$0xff]
    %v50 = vlaneseq
    %v51 = vand.u32 %v50, 127
    %52 = vset.pattern.permute.xlu0 0
    %53 = vperm.xlu0 %52, %v49
    %v54 = vpop.permute.xlu0 %53
    %vm55 = vcmp.eq.s32.totalorder %v54, %v51
    %v56 = vsel %vm55, 1, 0
    %v57 = vcvt.s32.f32 %v56
    %v58 = vld [vmem:[%s3] sm:$0xff]
    %v59 = vld [vmem:[%s3 + $0x8] sm:$0xff]
    %v60 = vld [vmem:[%s3 + $0x10] sm:$0xff]
    %v61 = vld [vmem:[%s3 + $0x18] sm:$0xff]
    %v62 = vld [vmem:[%s3 + $0x20] sm:$0xff]
    %vm63 = vcmask 326656
    %v65 = vsel %vm63, %v57, 0
    %67 = vmatprep.subr.mxu0 0.0
    %68 = vmatpush1.msra.mxu0 0.0
    %69 = vmatprep.subr.mxu0 0.0
    %70 = vmatpush1.msra.mxu0 0.0
    %71 = vmatprep.subr.mxu0 0.0
    %72 = vmatpush1.msra.mxu0 0.0
    %73 = vmatprep.subr.mxu0 0.0
    %74 = vmatpush1.msra.mxu0 0.0
    %75 = vmatprep.subr.mxu0 0.0
    %76 = vmatpush1.msra.mxu0 0.0
    %77 = vmatprep.subr.mxu0 0.0
    %78 = vmatpush1.msra.mxu0 0.0
    %79 = vmatprep.subr.mxu0 0.0
    %80 = vmatpush1.msra.mxu0 0.0
    %81 = vmatprep.subr.mxu0 0.0
    %82 = vmatpush1.msra.mxu0 0.0
    %83 = vmatprep.subr.mxu0 0.0
    %84 = vmatpush1.msra.mxu0 0.0
    %85 = vmatprep.subr.mxu0 0.0
    %86 = vmatpush1.msra.mxu0 0.0
    %87 = vmatprep.subr.mxu0 0.0
    %88 = vmatpush1.msra.mxu0 0.0
    %89 = vmatprep.subr.mxu0 0.0
    %90 = vmatpush1.msra.mxu0 %v62
    %91 = vmatprep.subr.mxu0 0.0
    %92 = vmatpush1.msra.mxu0 %v61
    %93 = vmatprep.subr.mxu0 0.0
    %94 = vmatpush1.msra.mxu0 %v60
    %95 = vmatprep.subr.mxu0 0.0
    %96 = vmatpush1.msra.mxu0 %v59
    %97 = vmatprep.subr.mxu0 0.0
    %98 = vmatpush1.msra.mxu0 %v58
    %99 = vmatprep.subr.mxu0 0.0
    %100 = vmatpush2.msra.mxu0 0.0
    %101 = vmatprep.subr.mxu0 0.0
    %102 = vmatpush2.msra.mxu0 0.0
    %103 = vmatprep.subr.mxu0 0.0
    %104 = vmatpush2.msra.mxu0 0.0
    %105 = vmatprep.subr.mxu0 0.0
    %106 = vmatpush2.msra.mxu0 0.0
    %107 = vmatprep.subr.mxu0 0.0
    %108 = vmatpush2.msra.mxu0 0.0
    %109 = vmatprep.subr.mxu0 0.0
    %110 = vmatpush2.msra.mxu0 0.0
    %111 = vmatprep.subr.mxu0 0.0
    %112 = vmatpush2.msra.mxu0 0.0
    %113 = vmatprep.subr.mxu0 0.0
    %114 = vmatpush2.msra.mxu0 0.0
    %115 = vmatprep.subr.mxu0 0.0
    %116 = vmatpush2.msra.mxu0 0.0
    %117 = vmatprep.subr.mxu0 0.0
    %118 = vmatpush2.msra.mxu0 0.0
    %119 = vmatprep.subr.mxu0 0.0
    %120 = vmatpush2.msra.mxu0 0.0
    %121 = vmatprep.subr.mxu0 0.0
    %122 = vmatpush2.msra.mxu0 0.0
    %123 = vmatprep.subr.mxu0 0.0
    %124 = vmatpush2.msra.mxu0 0.0
    %125 = vmatprep.subr.mxu0 0.0
    %126 = vmatpush2.msra.mxu0 0.0
    %127 = vmatprep.subr.mxu0 0.0
    %128 = vmatpush2.msra.mxu0 0.0
    %129 = vmatprep.subr.mxu0 0.0
    %130 = vmatpush2.msra.mxu0 0.0
    %131 = vmatprep.mubr.f32.mxu0 0.0
    %132 = vmatmul.mubr.f32.gmra.mxu0 %v65
    %v133 = vpop.f32.mrf.mxu0
    %v134 = vadd.f32 0.0, %v133
    %v135 = vpop.f32.mrf.mxu0
    %136 = vdwg.mxu0
    %v137 = vld [vmem:[%s1] sm:$0xff]
    %v138 = vld [vmem:[%s1 + $0x8] sm:$0xff]
    %v139 = vld [vmem:[%s1 + $0x10] sm:$0xff]
    %v140 = vld [vmem:[%s1 + $0x18] sm:$0xff]
    %v141 = vld [vmem:[%s1 + $0x20] sm:$0xff]
    %v142 = vld [vmem:[%s1 + $0x28] sm:$0xff]
    %v143 = vld [vmem:[%s1 + $0x30] sm:$0xff]
    %v144 = vld [vmem:[%s1 + $0x38] sm:$0xff]
    %v145 = vld [vmem:[%s1 + $0x40] sm:$0xff]
    %v146 = vld [vmem:[%s1 + $0x48] sm:$0xff]
    %147 = vset.pattern.permute.xlu0 0
    %148 = vperm.xlu0 %147, %v137
    %v149 = vpop.permute.xlu0 %148
    %150 = vset.pattern.permute.xlu0 0
    %151 = vperm.xlu0 %150, %v138
    %v152 = vpop.permute.xlu0 %151
    %153 = vset.pattern.permute.xlu0 0
    %154 = vperm.xlu0 %153, %v139
    %v155 = vpop.permute.xlu0 %154
    %156 = vset.pattern.permute.xlu0 0
    %157 = vperm.xlu0 %156, %v140
    %v158 = vpop.permute.xlu0 %157
    %159 = vset.pattern.permute.xlu0 0
    %160 = vperm.xlu0 %159, %v141
    %v161 = vpop.permute.xlu0 %160
    %162 = vset.pattern.permute.xlu0 0
    %163 = vperm.xlu0 %162, %v142
    %v164 = vpop.permute.xlu0 %163
    %165 = vset.pattern.permute.xlu0 0
    %166 = vperm.xlu0 %165, %v143
    %v167 = vpop.permute.xlu0 %166
    %168 = vset.pattern.permute.xlu0 0
    %169 = vperm.xlu0 %168, %v144
    %v170 = vpop.permute.xlu0 %169
    %171 = vset.pattern.permute.xlu0 0
    %172 = vperm.xlu0 %171, %v145
    %v173 = vpop.permute.xlu0 %172
    %174 = vset.pattern.permute.xlu0 0
    %175 = vperm.xlu0 %174, %v146
    %v176 = vpop.permute.xlu0 %175
    %vm177 = vcmp.eq.s32.totalorder %v149, %v51
    %vm178 = vcmp.eq.s32.totalorder %v152, %v51
    %vm179 = vcmp.eq.s32.totalorder %v155, %v51
    %vm180 = vcmp.eq.s32.totalorder %v158, %v51
    %vm181 = vcmp.eq.s32.totalorder %v161, %v51
    %vm182 = vcmp.eq.s32.totalorder %v164, %v51
    %vm183 = vcmp.eq.s32.totalorder %v167, %v51
    %vm184 = vcmp.eq.s32.totalorder %v170, %v51
    %vm185 = vcmp.eq.s32.totalorder %v173, %v51
    %vm186 = vcmp.eq.s32.totalorder %v176, %v51
    %v187 = vsel %vm177, 1, 0
    %v188 = vsel %vm178, 1, 0
    %v189 = vsel %vm179, 1, 0
    %v190 = vsel %vm180, 1, 0
    %v191 = vsel %vm181, 1, 0
    %v192 = vsel %vm182, 1, 0
    %v193 = vsel %vm183, 1, 0
    %v194 = vsel %vm184, 1, 0
    %v195 = vsel %vm185, 1, 0
    %v196 = vsel %vm186, 1, 0
    %v197 = vcvt.s32.f32 %v187
    %v198 = vcvt.s32.f32 %v188
    %v199 = vcvt.s32.f32 %v189
    %v200 = vcvt.s32.f32 %v190
    %v201 = vcvt.s32.f32 %v191
    %v202 = vcvt.s32.f32 %v192
    %v203 = vcvt.s32.f32 %v193
    %v204 = vcvt.s32.f32 %v194
    %v205 = vcvt.s32.f32 %v195
    %v206 = vcvt.s32.f32 %v196
    %v207 = vld [vmem:[%s4] sm:$0xff]
    %v208 = vld [vmem:[%s4 + $0x8] sm:$0xff]
    %v209 = vld [vmem:[%s4 + $0x10] sm:$0xff]
    %v210 = vld [vmem:[%s4 + $0x18] sm:$0x3]
    %vm211 = vcmask 211968
    %v213 = vsel %vm211, %v197, 0
    %v216 = vsel %vm211, %v198, 0
    %v219 = vsel %vm211, %v199, 0
    %v222 = vsel %vm211, %v200, 0
    %v225 = vsel %vm211, %v201, 0
    %v228 = vsel %vm211, %v202, 0
    %v231 = vsel %vm211, %v203, 0
    %v234 = vsel %vm211, %v204, 0
    %v237 = vsel %vm211, %v205, 0
    %v240 = vsel %vm211, %v206, 0
    %vm242 = vcmask 1041408
    %v244 = vsel %vm242, %v210, 0
    %246 = vmatprep.subr.mxu0 0.0
    %247 = vmatpush1.msra.mxu0 0.0
    %248 = vmatprep.subr.mxu0 0.0
    %249 = vmatpush1.msra.mxu0 0.0
    %250 = vmatprep.subr.mxu0 0.0
    %251 = vmatpush1.msra.mxu0 0.0
    %252 = vmatprep.subr.mxu0 0.0
    %253 = vmatpush1.msra.mxu0 0.0
    %254 = vmatprep.subr.mxu0 0.0
    %255 = vmatpush1.msra.mxu0 0.0
    %256 = vmatprep.subr.mxu0 0.0
    %257 = vmatpush1.msra.mxu0 0.0
    %258 = vmatprep.subr.mxu0 0.0
    %259 = vmatpush1.msra.mxu0 0.0
    %260 = vmatprep.subr.mxu0 0.0
    %261 = vmatpush1.msra.mxu0 0.0
    %262 = vmatprep.subr.mxu0 0.0
    %263 = vmatpush1.msra.mxu0 0.0
    %264 = vmatprep.subr.mxu0 0.0
    %265 = vmatpush1.msra.mxu0 0.0
    %266 = vmatprep.subr.mxu0 0.0
    %267 = vmatpush1.msra.mxu0 0.0
    %268 = vmatprep.subr.mxu0 0.0
    %269 = vmatpush1.msra.mxu0 0.0
    %270 = vmatprep.subr.mxu0 0.0
    %271 = vmatpush1.msra.mxu0 %v244
    %272 = vmatprep.subr.mxu0 0.0
    %273 = vmatpush1.msra.mxu0 %v209
    %274 = vmatprep.subr.mxu0 0.0
    %275 = vmatpush1.msra.mxu0 %v208
    %276 = vmatprep.subr.mxu0 0.0
    %277 = vmatpush1.msra.mxu0 %v207
    %278 = vmatprep.subr.mxu0 0.0
    %279 = vmatpush2.msra.mxu0 0.0
    %280 = vmatprep.subr.mxu0 0.0
    %281 = vmatpush2.msra.mxu0 0.0
    %282 = vmatprep.subr.mxu0 0.0
    %283 = vmatpush2.msra.mxu0 0.0
    %284 = vmatprep.subr.mxu0 0.0
    %285 = vmatpush2.msra.mxu0 0.0
    %286 = vmatprep.subr.mxu0 0.0
    %287 = vmatpush2.msra.mxu0 0.0
    %288 = vmatprep.subr.mxu0 0.0
    %289 = vmatpush2.msra.mxu0 0.0
    %290 = vmatprep.subr.mxu0 0.0
    %291 = vmatpush2.msra.mxu0 0.0
    %292 = vmatprep.subr.mxu0 0.0
    %293 = vmatpush2.msra.mxu0 0.0
    %294 = vmatprep.subr.mxu0 0.0
    %295 = vmatpush2.msra.mxu0 0.0
    %296 = vmatprep.subr.mxu0 0.0
    %297 = vmatpush2.msra.mxu0 0.0
    %298 = vmatprep.subr.mxu0 0.0
    %299 = vmatpush2.msra.mxu0 0.0
    %300 = vmatprep.subr.mxu0 0.0
    %301 = vmatpush2.msra.mxu0 0.0
    %302 = vmatprep.subr.mxu0 0.0
    %303 = vmatpush2.msra.mxu0 0.0
    %304 = vmatprep.subr.mxu0 0.0
    %305 = vmatpush2.msra.mxu0 0.0
    %306 = vmatprep.subr.mxu0 0.0
    %307 = vmatpush2.msra.mxu0 0.0
    %308 = vmatprep.subr.mxu0 0.0
    %309 = vmatpush2.msra.mxu0 0.0
    %310 = vmatprep.mubr.f32.mxu0 0.0
    %311 = vmatmul.mubr.f32.gmra.mxu0 %v213
    %v312 = vpop.f32.mrf.mxu0
    %v313 = vadd.f32 0.0, %v312
    %v314 = vpop.f32.mrf.mxu0
    %315 = vmatprep.mubr.f32.mxu0 0.0
    %316 = vmatmul.mubr.f32.gmra.mxu0 %v216
    %v317 = vpop.f32.mrf.mxu0
    %v318 = vadd.f32 0.0, %v317
    %v319 = vpop.f32.mrf.mxu0
    %320 = vmatprep.mubr.f32.mxu0 0.0
    %321 = vmatmul.mubr.f32.gmra.mxu0 %v219
    %v322 = vpop.f32.mrf.mxu0
    %v323 = vadd.f32 0.0, %v322
    %v324 = vpop.f32.mrf.mxu0
    %325 = vmatprep.mubr.f32.mxu0 0.0
    %326 = vmatmul.mubr.f32.gmra.mxu0 %v222
    %v327 = vpop.f32.mrf.mxu0
    %v328 = vadd.f32 0.0, %v327
    %v329 = vpop.f32.mrf.mxu0
    %330 = vmatprep.mubr.f32.mxu0 0.0
    %331 = vmatmul.mubr.f32.gmra.mxu0 %v225
    %v332 = vpop.f32.mrf.mxu0
    %v333 = vadd.f32 0.0, %v332
    %v334 = vpop.f32.mrf.mxu0
    %335 = vmatprep.mubr.f32.mxu0 0.0
    %336 = vmatmul.mubr.f32.gmra.mxu0 %v228
    %v337 = vpop.f32.mrf.mxu0
    %v338 = vadd.f32 0.0, %v337
    %v339 = vpop.f32.mrf.mxu0
    %340 = vmatprep.mubr.f32.mxu0 0.0
    %341 = vmatmul.mubr.f32.gmra.mxu0 %v231
    %v342 = vpop.f32.mrf.mxu0
    %v343 = vadd.f32 0.0, %v342
    %v344 = vpop.f32.mrf.mxu0
    %345 = vmatprep.mubr.f32.mxu0 0.0
    %346 = vmatmul.mubr.f32.gmra.mxu0 %v234
    %v347 = vpop.f32.mrf.mxu0
    %v348 = vadd.f32 0.0, %v347
    %v349 = vpop.f32.mrf.mxu0
    %350 = vmatprep.mubr.f32.mxu0 0.0
    %351 = vmatmul.mubr.f32.gmra.mxu0 %v237
    %v352 = vpop.f32.mrf.mxu0
    %v353 = vadd.f32 0.0, %v352
    %v354 = vpop.f32.mrf.mxu0
    %355 = vmatprep.mubr.f32.mxu0 0.0
    %356 = vmatmul.mubr.f32.gmra.mxu0 %v240
    %v357 = vpop.f32.mrf.mxu0
    %v358 = vadd.f32 0.0, %v357
    %v359 = vpop.f32.mrf.mxu0
    %360 = vdwg.mxu0
    %v361 = vld [vmem:[%s5] sm:$0xff]
    %v362 = vld [vmem:[%s7] sm:$0x1]
    %v364 = vlaneseq
    %v365 = vshrl.u32 %v364, 7
    %v366 = vsub.s32 0, %v365
    %v367 = vrot.slane %v362, %v366
    %vm369 = vcmask 64512
    %v371 = vsel %vm369, %v313, 0
    %v374 = vsel %vm369, %v318, 0
    %v377 = vsel %vm369, %v323, 0
    %v380 = vsel %vm369, %v328, 0
    %v383 = vsel %vm369, %v333, 0
    %v386 = vsel %vm369, %v338, 0
    %v389 = vsel %vm369, %v343, 0
    %v392 = vsel %vm369, %v348, 0
    %v395 = vsel %vm369, %v353, 0
    %v398 = vsel %vm369, %v358, 0
    %400 = vmatprep.subr.mxu0 0.0
    %401 = vmatpush1.msra.mxu0 0.0
    %402 = vmatprep.subr.mxu0 0.0
    %403 = vmatpush1.msra.mxu0 0.0
    %404 = vmatprep.subr.mxu0 0.0
    %405 = vmatpush1.msra.mxu0 0.0
    %406 = vmatprep.subr.mxu0 0.0
    %407 = vmatpush1.msra.mxu0 0.0
    %408 = vmatprep.subr.mxu0 0.0
    %409 = vmatpush1.msra.mxu0 0.0
    %410 = vmatprep.subr.mxu0 0.0
    %411 = vmatpush1.msra.mxu0 0.0
    %412 = vmatprep.subr.mxu0 0.0
    %413 = vmatpush1.msra.mxu0 0.0
    %414 = vmatprep.subr.mxu0 0.0
    %415 = vmatpush1.msra.mxu0 0.0
    %416 = vmatprep.subr.mxu0 0.0
    %417 = vmatpush1.msra.mxu0 0.0
    %418 = vmatprep.subr.mxu0 0.0
    %419 = vmatpush1.msra.mxu0 0.0
    %420 = vmatprep.subr.mxu0 0.0
    %421 = vmatpush1.msra.mxu0 0.0
    %422 = vmatprep.subr.mxu0 0.0
    %423 = vmatpush1.msra.mxu0 0.0
    %424 = vmatprep.subr.mxu0 0.0
    %425 = vmatpush1.msra.mxu0 0.0
    %426 = vmatprep.subr.mxu0 0.0
    %427 = vmatpush1.msra.mxu0 0.0
    %428 = vmatprep.subr.mxu0 0.0
    %429 = vmatpush1.msra.mxu0 0.0
    %430 = vmatprep.subr.mxu0 0.0
    %431 = vmatpush1.msra.mxu0 %v361
    %432 = vmatprep.subr.mxu0 0.0
    %433 = vmatpush2.msra.mxu0 0.0
    %434 = vmatprep.subr.mxu0 0.0
    %435 = vmatpush2.msra.mxu0 0.0
    %436 = vmatprep.subr.mxu0 0.0
    %437 = vmatpush2.msra.mxu0 0.0
    %438 = vmatprep.subr.mxu0 0.0
    %439 = vmatpush2.msra.mxu0 0.0
    %440 = vmatprep.subr.mxu0 0.0
    %441 = vmatpush2.msra.mxu0 0.0
    %442 = vmatprep.subr.mxu0 0.0
    %443 = vmatpush2.msra.mxu0 0.0
    %444 = vmatprep.subr.mxu0 0.0
    %445 = vmatpush2.msra.mxu0 0.0
    %446 = vmatprep.subr.mxu0 0.0
    %447 = vmatpush2.msra.mxu0 0.0
    %448 = vmatprep.subr.mxu0 0.0
    %449 = vmatpush2.msra.mxu0 0.0
    %450 = vmatprep.subr.mxu0 0.0
    %451 = vmatpush2.msra.mxu0 0.0
    %452 = vmatprep.subr.mxu0 0.0
    %453 = vmatpush2.msra.mxu0 0.0
    %454 = vmatprep.subr.mxu0 0.0
    %455 = vmatpush2.msra.mxu0 0.0
    %456 = vmatprep.subr.mxu0 0.0
    %457 = vmatpush2.msra.mxu0 0.0
    %458 = vmatprep.subr.mxu0 0.0
    %459 = vmatpush2.msra.mxu0 0.0
    %460 = vmatprep.subr.mxu0 0.0
    %461 = vmatpush2.msra.mxu0 0.0
    %462 = vmatprep.subr.mxu0 0.0
    %463 = vmatpush2.msra.mxu0 0.0
    %464 = vmatprep.mubr.f32.mxu0 0.0
    %465 = vmatmul.mubr.f32.gmra.mxu0 %v371
    %v466 = vpop.f32.mrf.mxu0
    %v467 = vadd.f32 %v367, %v466
    %v468 = vpop.f32.mrf.mxu0
    %469 = vmatprep.mubr.f32.mxu0 0.0
    %470 = vmatmul.mubr.f32.gmra.mxu0 %v374
    %v471 = vpop.f32.mrf.mxu0
    %v472 = vadd.f32 %v367, %v471
    %v473 = vpop.f32.mrf.mxu0
    %474 = vmatprep.mubr.f32.mxu0 0.0
    %475 = vmatmul.mubr.f32.gmra.mxu0 %v377
    %v476 = vpop.f32.mrf.mxu0
    %v477 = vadd.f32 %v367, %v476
    %v478 = vpop.f32.mrf.mxu0
    %479 = vmatprep.mubr.f32.mxu0 0.0
    %480 = vmatmul.mubr.f32.gmra.mxu0 %v380
    %v481 = vpop.f32.mrf.mxu0
    %v482 = vadd.f32 %v367, %v481
    %v483 = vpop.f32.mrf.mxu0
    %484 = vmatprep.mubr.f32.mxu0 0.0
    %485 = vmatmul.mubr.f32.gmra.mxu0 %v383
    %v486 = vpop.f32.mrf.mxu0
    %v487 = vadd.f32 %v367, %v486
    %v488 = vpop.f32.mrf.mxu0
    %489 = vmatprep.mubr.f32.mxu0 0.0
    %490 = vmatmul.mubr.f32.gmra.mxu0 %v386
    %v491 = vpop.f32.mrf.mxu0
    %v492 = vadd.f32 %v367, %v491
    %v493 = vpop.f32.mrf.mxu0
    %494 = vmatprep.mubr.f32.mxu0 0.0
    %495 = vmatmul.mubr.f32.gmra.mxu0 %v389
    %v496 = vpop.f32.mrf.mxu0
    %v497 = vadd.f32 %v367, %v496
    %v498 = vpop.f32.mrf.mxu0
    %499 = vmatprep.mubr.f32.mxu0 0.0
    %500 = vmatmul.mubr.f32.gmra.mxu0 %v392
    %v501 = vpop.f32.mrf.mxu0
    %v502 = vadd.f32 %v367, %v501
    %v503 = vpop.f32.mrf.mxu0
    %504 = vmatprep.mubr.f32.mxu0 0.0
    %505 = vmatmul.mubr.f32.gmra.mxu0 %v395
    %v506 = vpop.f32.mrf.mxu0
    %v507 = vadd.f32 %v367, %v506
    %v508 = vpop.f32.mrf.mxu0
    %509 = vmatprep.mubr.f32.mxu0 0.0
    %510 = vmatmul.mubr.f32.gmra.mxu0 %v398
    %v511 = vpop.f32.mrf.mxu0
    %v512 = vadd.f32 %v367, %v511
    %v513 = vpop.f32.mrf.mxu0
    %514 = vdwg.mxu0
    %v515 = vld [vmem:[%s2] sm:$0xff]
    %v516 = vld [vmem:[%s6] sm:$0xf]
    %v517 = vld [vmem:[%s6 + $0x4] sm:$0xf]
    %v520 = vunpack.c.l.b16 %v516
    %v521 = vunpack.c.l.b16 %v517
    %v522 = vpack.c.b16 %v521, %v520
    %vm524 = vcmask 130048
    %v526 = vsel %vm524, 0, 0
    %528 = vmatprep.subr.bf16.mxu0 0
    %529 = vmatpush1.bf16.msra.mxu0 0
    %530 = vmatprep.subr.bf16.mxu0 0
    %531 = vmatpush1.bf16.msra.mxu0 0
    %532 = vmatprep.subr.bf16.mxu0 0
    %533 = vmatpush1.bf16.msra.mxu0 0
    %534 = vmatprep.subr.bf16.mxu0 0
    %535 = vmatpush1.bf16.msra.mxu0 0
    %536 = vmatprep.subr.bf16.mxu0 0
    %537 = vmatpush1.bf16.msra.mxu0 0
    %538 = vmatprep.subr.bf16.mxu0 0
    %539 = vmatpush1.bf16.msra.mxu0 0
    %540 = vmatprep.subr.bf16.mxu0 0
    %541 = vmatpush1.bf16.msra.mxu0 0
    %542 = vmatprep.subr.bf16.mxu0 0
    %543 = vmatpush1.bf16.msra.mxu0 %v522
    %544 = vmatprep.subr.bf16.mxu0 0
    %545 = vmatpush2.bf16.msra.mxu0 0
    %546 = vmatprep.subr.bf16.mxu0 0
    %547 = vmatpush2.bf16.msra.mxu0 0
    %548 = vmatprep.subr.bf16.mxu0 0
    %549 = vmatpush2.bf16.msra.mxu0 0
    %550 = vmatprep.subr.bf16.mxu0 0
    %551 = vmatpush2.bf16.msra.mxu0 0
    %552 = vmatprep.subr.bf16.mxu0 0
    %553 = vmatpush2.bf16.msra.mxu0 0
    %554 = vmatprep.subr.bf16.mxu0 0
    %555 = vmatpush2.bf16.msra.mxu0 0
    %556 = vmatprep.subr.bf16.mxu0 0
    %557 = vmatpush2.bf16.msra.mxu0 0
    %558 = vmatprep.subr.bf16.mxu0 0
    %559 = vmatpush2.bf16.msra.mxu0 0
    %560 = vmatprep.mubr.bf16.mxu0 0
    %561 = vmatmul.mubr.bf16.gmra.mxu0 %v526
    %v562 = vpop.f32.mrf.mxu0
    %v563 = vadd.f32 0.0, %v562
    %v564 = vpop.f32.mrf.mxu0
    %v565 = vpop.f32.mrf.mxu0
    %v566 = vpop.f32.mrf.mxu0
    %567 = vdwg.mxu0
    %v568 = vadd.f32 %v467, %v563
    %v569 = vxor.u32 %v568, 2147483648
    %v570 = vmul.f32 %v569, 1.442695
    %v571 = vpow.pop %v570
    %v572 = vadd.f32 %v571, 1.0
    %v573 = vrcp.pop %v572
    %v574 = vmul.f32 1.0, %v573
    %v575 = vmul.f32 %v574, 2.0
    %v576 = vsub.f32 %v575, 1.0
    %v577 = vmul.f32 %v574, 0.0
    %579 = vrot.lane.b32.xlu0 %v576, 96
    %v580 = vpop.permute.xlu0 %579
    %v582 = vmul.f32 %v574, %v580
    %584 = vrot.lane.b32.xlu0 %v582, 16
    %v585 = vpop.permute.xlu0 %584
    %v587 = vadd.f32 %v577, %v585
    %v588 = vtanh.pop %v587
    %590 = vrot.lane.b32.xlu0 %v588, 32
    %v591 = vpop.permute.xlu0 %590
    %v593 = vmul.f32 %v574, %v591
    %vm594 = vcmp.gt.s32.totalorder %v515, 0
    %v595 = vsel %vm594, 1, 0
    %596 = vset.pattern.permute.xlu0 0
    %597 = vperm.xlu0 %596, %v595
    %v598 = vpop.permute.xlu0 %597
    %vm599 = vcmp.eq.s32.totalorder %v598, 1
    %v600 = vsel %vm599, %v593, 0.0
    %v601 = vsel %vm599, %v587, 0.0
    %v602 = vpack.c.bf16 %v600, %v600
    %604 = vrot.lane.b32.xlu0 %v602, 80
    %v605 = vpop.permute.xlu0 %604
    %v607 = vsel %vm524, %v605, 0
    %609 = vmatprep.subr.bf16.mxu0 0
    %610 = vmatpush1.bf16.msra.mxu0 0
    %611 = vmatprep.subr.bf16.mxu0 0
    %612 = vmatpush1.bf16.msra.mxu0 0
    %613 = vmatprep.subr.bf16.mxu0 0
    %614 = vmatpush1.bf16.msra.mxu0 0
    %615 = vmatprep.subr.bf16.mxu0 0
    %616 = vmatpush1.bf16.msra.mxu0 0
    %617 = vmatprep.subr.bf16.mxu0 0
    %618 = vmatpush1.bf16.msra.mxu0 0
    %619 = vmatprep.subr.bf16.mxu0 0
    %620 = vmatpush1.bf16.msra.mxu0 0
    %621 = vmatprep.subr.bf16.mxu0 0
    %622 = vmatpush1.bf16.msra.mxu0 0
    %623 = vmatprep.subr.bf16.mxu0 0
    %624 = vmatpush1.bf16.msra.mxu0 %v522
    %625 = vmatprep.subr.bf16.mxu0 0
    %626 = vmatpush2.bf16.msra.mxu0 0
    %627 = vmatprep.subr.bf16.mxu0 0
    %628 = vmatpush2.bf16.msra.mxu0 0
    %629 = vmatprep.subr.bf16.mxu0 0
    %630 = vmatpush2.bf16.msra.mxu0 0
    %631 = vmatprep.subr.bf16.mxu0 0
    %632 = vmatpush2.bf16.msra.mxu0 0
    %633 = vmatprep.subr.bf16.mxu0 0
    %634 = vmatpush2.bf16.msra.mxu0 0
    %635 = vmatprep.subr.bf16.mxu0 0
    %636 = vmatpush2.bf16.msra.mxu0 0
    %637 = vmatprep.subr.bf16.mxu0 0
    %638 = vmatpush2.bf16.msra.mxu0 0
    %639 = vmatprep.subr.bf16.mxu0 0
    %640 = vmatpush2.bf16.msra.mxu0 0
    %641 = vmatprep.mubr.bf16.mxu0 0
    %642 = vmatmul.mubr.bf16.gmra.mxu0 %v607
    %v643 = vpop.f32.mrf.mxu0
    %v644 = vadd.f32 0.0, %v643
    %v645 = vpop.f32.mrf.mxu0
    %v646 = vpop.f32.mrf.mxu0
    %v647 = vpop.f32.mrf.mxu0
    %648 = vdwg.mxu0
    %v649 = vadd.f32 %v472, %v644
    %v650 = vxor.u32 %v649, 2147483648
    %v651 = vmul.f32 %v650, 1.442695
    %v652 = vpow.pop %v651
    %v653 = vadd.f32 %v652, 1.0
    %v654 = vrcp.pop %v653
    %v655 = vmul.f32 1.0, %v654
    %v656 = vmul.f32 %v655, 2.0
    %v657 = vsub.f32 %v656, 1.0
    %v658 = vmul.f32 %v655, %v601
    %660 = vrot.lane.b32.xlu0 %v657, 96
    %v661 = vpop.permute.xlu0 %660
    %v663 = vmul.f32 %v655, %v661
    %665 = vrot.lane.b32.xlu0 %v663, 16
    %v666 = vpop.permute.xlu0 %665
    %v668 = vadd.f32 %v658, %v666
    %v669 = vtanh.pop %v668
    %671 = vrot.lane.b32.xlu0 %v669, 32
    %v672 = vpop.permute.xlu0 %671
    %v674 = vmul.f32 %v655, %v672
    %vm675 = vcmp.gt.s32.totalorder %v515, 1
    %v676 = vsel %vm675, 1, 0
    %677 = vset.pattern.permute.xlu0 0
    %678 = vperm.xlu0 %677, %v676
    %v679 = vpop.permute.xlu0 %678
    %vm680 = vcmp.eq.s32.totalorder %v679, 1
    %v681 = vsel %vm680, %v674, %v600
    %v682 = vsel %vm680, %v668, %v601
    %v683 = vpack.c.bf16 %v681, %v681
    %685 = vrot.lane.b32.xlu0 %v683, 80
    %v686 = vpop.permute.xlu0 %685
    %v688 = vsel %vm524, %v686, 0
    %690 = vmatprep.subr.bf16.mxu0 0
    %691 = vmatpush1.bf16.msra.mxu0 0
    %692 = vmatprep.subr.bf16.mxu0 0
    %693 = vmatpush1.bf16.msra.mxu0 0
    %694 = vmatprep.subr.bf16.mxu0 0
    %695 = vmatpush1.bf16.msra.mxu0 0
    %696 = vmatprep.subr.bf16.mxu0 0
    %697 = vmatpush1.bf16.msra.mxu0 0
    %698 = vmatprep.subr.bf16.mxu0 0
    %699 = vmatpush1.bf16.msra.mxu0 0
    %700 = vmatprep.subr.bf16.mxu0 0
    %701 = vmatpush1.bf16.msra.mxu0 0
    %702 = vmatprep.subr.bf16.mxu0 0
    %703 = vmatpush1.bf16.msra.mxu0 0
    %704 = vmatprep.subr.bf16.mxu0 0
    %705 = vmatpush1.bf16.msra.mxu0 %v522
    %706 = vmatprep.subr.bf16.mxu0 0
    %707 = vmatpush2.bf16.msra.mxu0 0
    %708 = vmatprep.subr.bf16.mxu0 0
    %709 = vmatpush2.bf16.msra.mxu0 0
    %710 = vmatprep.subr.bf16.mxu0 0
    %711 = vmatpush2.bf16.msra.mxu0 0
    %712 = vmatprep.subr.bf16.mxu0 0
    %713 = vmatpush2.bf16.msra.mxu0 0
    %714 = vmatprep.subr.bf16.mxu0 0
    %715 = vmatpush2.bf16.msra.mxu0 0
    %716 = vmatprep.subr.bf16.mxu0 0
    %717 = vmatpush2.bf16.msra.mxu0 0
    %718 = vmatprep.subr.bf16.mxu0 0
    %719 = vmatpush2.bf16.msra.mxu0 0
    %720 = vmatprep.subr.bf16.mxu0 0
    %721 = vmatpush2.bf16.msra.mxu0 0
    %722 = vmatprep.mubr.bf16.mxu0 0
    %723 = vmatmul.mubr.bf16.gmra.mxu0 %v688
    %v724 = vpop.f32.mrf.mxu0
    %v725 = vadd.f32 0.0, %v724
    %v726 = vpop.f32.mrf.mxu0
    %v727 = vpop.f32.mrf.mxu0
    %v728 = vpop.f32.mrf.mxu0
    %729 = vdwg.mxu0
    %v730 = vadd.f32 %v477, %v725
    %v731 = vxor.u32 %v730, 2147483648
    %v732 = vmul.f32 %v731, 1.442695
    %v733 = vpow.pop %v732
    %v734 = vadd.f32 %v733, 1.0
    %v735 = vrcp.pop %v734
    %v736 = vmul.f32 1.0, %v735
    %v737 = vmul.f32 %v736, 2.0
    %v738 = vsub.f32 %v737, 1.0
    %v739 = vmul.f32 %v736, %v682
    %741 = vrot.lane.b32.xlu0 %v738, 96
    %v742 = vpop.permute.xlu0 %741
    %v744 = vmul.f32 %v736, %v742
    %746 = vrot.lane.b32.xlu0 %v744, 16
    %v747 = vpop.permute.xlu0 %746
    %v749 = vadd.f32 %v739, %v747
    %v750 = vtanh.pop %v749
    %752 = vrot.lane.b32.xlu0 %v750, 32
    %v753 = vpop.permute.xlu0 %752
    %v755 = vmul.f32 %v736, %v753
    %vm756 = vcmp.gt.s32.totalorder %v515, 2
    %v757 = vsel %vm756, 1, 0
    %758 = vset.pattern.permute.xlu0 0
    %759 = vperm.xlu0 %758, %v757
    %v760 = vpop.permute.xlu0 %759
    %vm761 = vcmp.eq.s32.totalorder %v760, 1
    %v762 = vsel %vm761, %v755, %v681
    %v763 = vsel %vm761, %v749, %v682
    %v764 = vpack.c.bf16 %v762, %v762
    %766 = vrot.lane.b32.xlu0 %v764, 80
    %v767 = vpop.permute.xlu0 %766
    %v769 = vsel %vm524, %v767, 0
    %771 = vmatprep.subr.bf16.mxu0 0
    %772 = vmatpush1.bf16.msra.mxu0 0
    %773 = vmatprep.subr.bf16.mxu0 0
    %774 = vmatpush1.bf16.msra.mxu0 0
    %775 = vmatprep.subr.bf16.mxu0 0
    %776 = vmatpush1.bf16.msra.mxu0 0
    %777 = vmatprep.subr.bf16.mxu0 0
    %778 = vmatpush1.bf16.msra.mxu0 0
    %779 = vmatprep.subr.bf16.mxu0 0
    %780 = vmatpush1.bf16.msra.mxu0 0
    %781 = vmatprep.subr.bf16.mxu0 0
    %782 = vmatpush1.bf16.msra.mxu0 0
    %783 = vmatprep.subr.bf16.mxu0 0
    %784 = vmatpush1.bf16.msra.mxu0 0
    %785 = vmatprep.subr.bf16.mxu0 0
    %786 = vmatpush1.bf16.msra.mxu0 %v522
    %787 = vmatprep.subr.bf16.mxu0 0
    %788 = vmatpush2.bf16.msra.mxu0 0
    %789 = vmatprep.subr.bf16.mxu0 0
    %790 = vmatpush2.bf16.msra.mxu0 0
    %791 = vmatprep.subr.bf16.mxu0 0
    %792 = vmatpush2.bf16.msra.mxu0 0
    %793 = vmatprep.subr.bf16.mxu0 0
    %794 = vmatpush2.bf16.msra.mxu0 0
    %795 = vmatprep.subr.bf16.mxu0 0
    %796 = vmatpush2.bf16.msra.mxu0 0
    %797 = vmatprep.subr.bf16.mxu0 0
    %798 = vmatpush2.bf16.msra.mxu0 0
    %799 = vmatprep.subr.bf16.mxu0 0
    %800 = vmatpush2.bf16.msra.mxu0 0
    %801 = vmatprep.subr.bf16.mxu0 0
    %802 = vmatpush2.bf16.msra.mxu0 0
    %803 = vmatprep.mubr.bf16.mxu0 0
    %804 = vmatmul.mubr.bf16.gmra.mxu0 %v769
    %v805 = vpop.f32.mrf.mxu0
    %v806 = vadd.f32 0.0, %v805
    %v807 = vpop.f32.mrf.mxu0
    %v808 = vpop.f32.mrf.mxu0
    %v809 = vpop.f32.mrf.mxu0
    %810 = vdwg.mxu0
    %v811 = vadd.f32 %v482, %v806
    %v812 = vxor.u32 %v811, 2147483648
    %v813 = vmul.f32 %v812, 1.442695
    %v814 = vpow.pop %v813
    %v815 = vadd.f32 %v814, 1.0
    %v816 = vrcp.pop %v815
    %v817 = vmul.f32 1.0, %v816
    %v818 = vmul.f32 %v817, 2.0
    %v819 = vsub.f32 %v818, 1.0
    %v820 = vmul.f32 %v817, %v763
    %822 = vrot.lane.b32.xlu0 %v819, 96
    %v823 = vpop.permute.xlu0 %822
    %v825 = vmul.f32 %v817, %v823
    %827 = vrot.lane.b32.xlu0 %v825, 16
    %v828 = vpop.permute.xlu0 %827
    %v830 = vadd.f32 %v820, %v828
    %v831 = vtanh.pop %v830
    %833 = vrot.lane.b32.xlu0 %v831, 32
    %v834 = vpop.permute.xlu0 %833
    %v836 = vmul.f32 %v817, %v834
    %vm837 = vcmp.gt.s32.totalorder %v515, 3
    %v838 = vsel %vm837, 1, 0
    %839 = vset.pattern.permute.xlu0 0
    %840 = vperm.xlu0 %839, %v838
    %v841 = vpop.permute.xlu0 %840
    %vm842 = vcmp.eq.s32.totalorder %v841, 1
    %v843 = vsel %vm842, %v836, %v762
    %v844 = vsel %vm842, %v830, %v763
    %v845 = vpack.c.bf16 %v843, %v843
    %847 = vrot.lane.b32.xlu0 %v845, 80
    %v848 = vpop.permute.xlu0 %847
    %v850 = vsel %vm524, %v848, 0
    %852 = vmatprep.subr.bf16.mxu0 0
    %853 = vmatpush1.bf16.msra.mxu0 0
    %854 = vmatprep.subr.bf16.mxu0 0
    %855 = vmatpush1.bf16.msra.mxu0 0
    %856 = vmatprep.subr.bf16.mxu0 0
    %857 = vmatpush1.bf16.msra.mxu0 0
    %858 = vmatprep.subr.bf16.mxu0 0
    %859 = vmatpush1.bf16.msra.mxu0 0
    %860 = vmatprep.subr.bf16.mxu0 0
    %861 = vmatpush1.bf16.msra.mxu0 0
    %862 = vmatprep.subr.bf16.mxu0 0
    %863 = vmatpush1.bf16.msra.mxu0 0
    %864 = vmatprep.subr.bf16.mxu0 0
    %865 = vmatpush1.bf16.msra.mxu0 0
    %866 = vmatprep.subr.bf16.mxu0 0
    %867 = vmatpush1.bf16.msra.mxu0 %v522
    %868 = vmatprep.subr.bf16.mxu0 0
    %869 = vmatpush2.bf16.msra.mxu0 0
    %870 = vmatprep.subr.bf16.mxu0 0
    %871 = vmatpush2.bf16.msra.mxu0 0
    %872 = vmatprep.subr.bf16.mxu0 0
    %873 = vmatpush2.bf16.msra.mxu0 0
    %874 = vmatprep.subr.bf16.mxu0 0
    %875 = vmatpush2.bf16.msra.mxu0 0
    %876 = vmatprep.subr.bf16.mxu0 0
    %877 = vmatpush2.bf16.msra.mxu0 0
    %878 = vmatprep.subr.bf16.mxu0 0
    %879 = vmatpush2.bf16.msra.mxu0 0
    %880 = vmatprep.subr.bf16.mxu0 0
    %881 = vmatpush2.bf16.msra.mxu0 0
    %882 = vmatprep.subr.bf16.mxu0 0
    %883 = vmatpush2.bf16.msra.mxu0 0
    %884 = vmatprep.mubr.bf16.mxu0 0
    %885 = vmatmul.mubr.bf16.gmra.mxu0 %v850
    %v886 = vpop.f32.mrf.mxu0
    %v887 = vadd.f32 0.0, %v886
    %v888 = vpop.f32.mrf.mxu0
    %v889 = vpop.f32.mrf.mxu0
    %v890 = vpop.f32.mrf.mxu0
    %891 = vdwg.mxu0
    %v892 = vadd.f32 %v487, %v887
    %v893 = vxor.u32 %v892, 2147483648
    %v894 = vmul.f32 %v893, 1.442695
    %v895 = vpow.pop %v894
    %v896 = vadd.f32 %v895, 1.0
    %v897 = vrcp.pop %v896
    %v898 = vmul.f32 1.0, %v897
    %v899 = vmul.f32 %v898, 2.0
    %v900 = vsub.f32 %v899, 1.0
    %v901 = vmul.f32 %v898, %v844
    %903 = vrot.lane.b32.xlu0 %v900, 96
    %v904 = vpop.permute.xlu0 %903
    %v906 = vmul.f32 %v898, %v904
    %908 = vrot.lane.b32.xlu0 %v906, 16
    %v909 = vpop.permute.xlu0 %908
    %v911 = vadd.f32 %v901, %v909
    %v912 = vtanh.pop %v911
    %914 = vrot.lane.b32.xlu0 %v912, 32
    %v915 = vpop.permute.xlu0 %914
    %v917 = vmul.f32 %v898, %v915
    %vm918 = vcmp.gt.s32.totalorder %v515, 4
    %v919 = vsel %vm918, 1, 0
    %920 = vset.pattern.permute.xlu0 0
    %921 = vperm.xlu0 %920, %v919
    %v922 = vpop.permute.xlu0 %921
    %vm923 = vcmp.eq.s32.totalorder %v922, 1
    %v924 = vsel %vm923, %v917, %v843
    %v925 = vsel %vm923, %v911, %v844
    %v926 = vpack.c.bf16 %v924, %v924
    %928 = vrot.lane.b32.xlu0 %v926, 80
    %v929 = vpop.permute.xlu0 %928
    %v931 = vsel %vm524, %v929, 0
    %933 = vmatprep.subr.bf16.mxu0 0
    %934 = vmatpush1.bf16.msra.mxu0 0
    %935 = vmatprep.subr.bf16.mxu0 0
    %936 = vmatpush1.bf16.msra.mxu0 0
    %937 = vmatprep.subr.bf16.mxu0 0
    %938 = vmatpush1.bf16.msra.mxu0 0
    %939 = vmatprep.subr.bf16.mxu0 0
    %940 = vmatpush1.bf16.msra.mxu0 0
    %941 = vmatprep.subr.bf16.mxu0 0
    %942 = vmatpush1.bf16.msra.mxu0 0
    %943 = vmatprep.subr.bf16.mxu0 0
    %944 = vmatpush1.bf16.msra.mxu0 0
    %945 = vmatprep.subr.bf16.mxu0 0
    %946 = vmatpush1.bf16.msra.mxu0 0
    %947 = vmatprep.subr.bf16.mxu0 0
    %948 = vmatpush1.bf16.msra.mxu0 %v522
    %949 = vmatprep.subr.bf16.mxu0 0
    %950 = vmatpush2.bf16.msra.mxu0 0
    %951 = vmatprep.subr.bf16.mxu0 0
    %952 = vmatpush2.bf16.msra.mxu0 0
    %953 = vmatprep.subr.bf16.mxu0 0
    %954 = vmatpush2.bf16.msra.mxu0 0
    %955 = vmatprep.subr.bf16.mxu0 0
    %956 = vmatpush2.bf16.msra.mxu0 0
    %957 = vmatprep.subr.bf16.mxu0 0
    %958 = vmatpush2.bf16.msra.mxu0 0
    %959 = vmatprep.subr.bf16.mxu0 0
    %960 = vmatpush2.bf16.msra.mxu0 0
    %961 = vmatprep.subr.bf16.mxu0 0
    %962 = vmatpush2.bf16.msra.mxu0 0
    %963 = vmatprep.subr.bf16.mxu0 0
    %964 = vmatpush2.bf16.msra.mxu0 0
    %965 = vmatprep.mubr.bf16.mxu0 0
    %966 = vmatmul.mubr.bf16.gmra.mxu0 %v931
    %v967 = vpop.f32.mrf.mxu0
    %v968 = vadd.f32 0.0, %v967
    %v969 = vpop.f32.mrf.mxu0
    %v970 = vpop.f32.mrf.mxu0
    %v971 = vpop.f32.mrf.mxu0
    %972 = vdwg.mxu0
    %v973 = vadd.f32 %v492, %v968
    %v974 = vxor.u32 %v973, 2147483648
    %v975 = vmul.f32 %v974, 1.442695
    %v976 = vpow.pop %v975
    %v977 = vadd.f32 %v976, 1.0
    %v978 = vrcp.pop %v977
    %v979 = vmul.f32 1.0, %v978
    %v980 = vmul.f32 %v979, 2.0
    %v981 = vsub.f32 %v980, 1.0
    %v982 = vmul.f32 %v979, %v925
    %984 = vrot.lane.b32.xlu0 %v981, 96
    %v985 = vpop.permute.xlu0 %984
    %v987 = vmul.f32 %v979, %v985
    %989 = vrot.lane.b32.xlu0 %v987, 16
    %v990 = vpop.permute.xlu0 %989
    %v992 = vadd.f32 %v982, %v990
    %v993 = vtanh.pop %v992
    %995 = vrot.lane.b32.xlu0 %v993, 32
    %v996 = vpop.permute.xlu0 %995
    %v998 = vmul.f32 %v979, %v996
    %vm999 = vcmp.gt.s32.totalorder %v515, 5
    %v1000 = vsel %vm999, 1, 0
    %1001 = vset.pattern.permute.xlu0 0
    %1002 = vperm.xlu0 %1001, %v1000
    %v1003 = vpop.permute.xlu0 %1002
    %vm1004 = vcmp.eq.s32.totalorder %v1003, 1
    %v1005 = vsel %vm1004, %v998, %v924
    %v1006 = vsel %vm1004, %v992, %v925
    %v1007 = vpack.c.bf16 %v1005, %v1005
    %1009 = vrot.lane.b32.xlu0 %v1007, 80
    %v1010 = vpop.permute.xlu0 %1009
    %v1012 = vsel %vm524, %v1010, 0
    %1014 = vmatprep.subr.bf16.mxu0 0
    %1015 = vmatpush1.bf16.msra.mxu0 0
    %1016 = vmatprep.subr.bf16.mxu0 0
    %1017 = vmatpush1.bf16.msra.mxu0 0
    %1018 = vmatprep.subr.bf16.mxu0 0
    %1019 = vmatpush1.bf16.msra.mxu0 0
    %1020 = vmatprep.subr.bf16.mxu0 0
    %1021 = vmatpush1.bf16.msra.mxu0 0
    %1022 = vmatprep.subr.bf16.mxu0 0
    %1023 = vmatpush1.bf16.msra.mxu0 0
    %1024 = vmatprep.subr.bf16.mxu0 0
    %1025 = vmatpush1.bf16.msra.mxu0 0
    %1026 = vmatprep.subr.bf16.mxu0 0
    %1027 = vmatpush1.bf16.msra.mxu0 0
    %1028 = vmatprep.subr.bf16.mxu0 0
    %1029 = vmatpush1.bf16.msra.mxu0 %v522
    %1030 = vmatprep.subr.bf16.mxu0 0
    %1031 = vmatpush2.bf16.msra.mxu0 0
    %1032 = vmatprep.subr.bf16.mxu0 0
    %1033 = vmatpush2.bf16.msra.mxu0 0
    %1034 = vmatprep.subr.bf16.mxu0 0
    %1035 = vmatpush2.bf16.msra.mxu0 0
    %1036 = vmatprep.subr.bf16.mxu0 0
    %1037 = vmatpush2.bf16.msra.mxu0 0
    %1038 = vmatprep.subr.bf16.mxu0 0
    %1039 = vmatpush2.bf16.msra.mxu0 0
    %1040 = vmatprep.subr.bf16.mxu0 0
    %1041 = vmatpush2.bf16.msra.mxu0 0
    %1042 = vmatprep.subr.bf16.mxu0 0
    %1043 = vmatpush2.bf16.msra.mxu0 0
    %1044 = vmatprep.subr.bf16.mxu0 0
    %1045 = vmatpush2.bf16.msra.mxu0 0
    %1046 = vmatprep.mubr.bf16.mxu0 0
    %1047 = vmatmul.mubr.bf16.gmra.mxu0 %v1012
    %v1048 = vpop.f32.mrf.mxu0
    %v1049 = vadd.f32 0.0, %v1048
    %v1050 = vpop.f32.mrf.mxu0
    %v1051 = vpop.f32.mrf.mxu0
    %v1052 = vpop.f32.mrf.mxu0
    %1053 = vdwg.mxu0
    %v1054 = vadd.f32 %v497, %v1049
    %v1055 = vxor.u32 %v1054, 2147483648
    %v1056 = vmul.f32 %v1055, 1.442695
    %v1057 = vpow.pop %v1056
    %v1058 = vadd.f32 %v1057, 1.0
    %v1059 = vrcp.pop %v1058
    %v1060 = vmul.f32 1.0, %v1059
    %v1061 = vmul.f32 %v1060, 2.0
    %v1062 = vsub.f32 %v1061, 1.0
    %v1063 = vmul.f32 %v1060, %v1006
    %1065 = vrot.lane.b32.xlu0 %v1062, 96
    %v1066 = vpop.permute.xlu0 %1065
    %v1068 = vmul.f32 %v1060, %v1066
    %1070 = vrot.lane.b32.xlu0 %v1068, 16
    %v1071 = vpop.permute.xlu0 %1070
    %v1073 = vadd.f32 %v1063, %v1071
    %v1074 = vtanh.pop %v1073
    %1076 = vrot.lane.b32.xlu0 %v1074, 32
    %v1077 = vpop.permute.xlu0 %1076
    %v1079 = vmul.f32 %v1060, %v1077
    %vm1080 = vcmp.gt.s32.totalorder %v515, 6
    %v1081 = vsel %vm1080, 1, 0
    %1082 = vset.pattern.permute.xlu0 0
    %1083 = vperm.xlu0 %1082, %v1081
    %v1084 = vpop.permute.xlu0 %1083
    %vm1085 = vcmp.eq.s32.totalorder %v1084, 1
    %v1086 = vsel %vm1085, %v1079, %v1005
    %v1087 = vsel %vm1085, %v1073, %v1006
    %v1088 = vpack.c.bf16 %v1086, %v1086
    %1090 = vrot.lane.b32.xlu0 %v1088, 80
    %v1091 = vpop.permute.xlu0 %1090
    %v1093 = vsel %vm524, %v1091, 0
    %1095 = vmatprep.subr.bf16.mxu0 0
    %1096 = vmatpush1.bf16.msra.mxu0 0
    %1097 = vmatprep.subr.bf16.mxu0 0
    %1098 = vmatpush1.bf16.msra.mxu0 0
    %1099 = vmatprep.subr.bf16.mxu0 0
    %1100 = vmatpush1.bf16.msra.mxu0 0
    %1101 = vmatprep.subr.bf16.mxu0 0
    %1102 = vmatpush1.bf16.msra.mxu0 0
    %1103 = vmatprep.subr.bf16.mxu0 0
    %1104 = vmatpush1.bf16.msra.mxu0 0
    %1105 = vmatprep.subr.bf16.mxu0 0
    %1106 = vmatpush1.bf16.msra.mxu0 0
    %1107 = vmatprep.subr.bf16.mxu0 0
    %1108 = vmatpush1.bf16.msra.mxu0 0
    %1109 = vmatprep.subr.bf16.mxu0 0
    %1110 = vmatpush1.bf16.msra.mxu0 %v522
    %1111 = vmatprep.subr.bf16.mxu0 0
    %1112 = vmatpush2.bf16.msra.mxu0 0
    %1113 = vmatprep.subr.bf16.mxu0 0
    %1114 = vmatpush2.bf16.msra.mxu0 0
    %1115 = vmatprep.subr.bf16.mxu0 0
    %1116 = vmatpush2.bf16.msra.mxu0 0
    %1117 = vmatprep.subr.bf16.mxu0 0
    %1118 = vmatpush2.bf16.msra.mxu0 0
    %1119 = vmatprep.subr.bf16.mxu0 0
    %1120 = vmatpush2.bf16.msra.mxu0 0
    %1121 = vmatprep.subr.bf16.mxu0 0
    %1122 = vmatpush2.bf16.msra.mxu0 0
    %1123 = vmatprep.subr.bf16.mxu0 0
    %1124 = vmatpush2.bf16.msra.mxu0 0
    %1125 = vmatprep.subr.bf16.mxu0 0
    %1126 = vmatpush2.bf16.msra.mxu0 0
    %1127 = vmatprep.mubr.bf16.mxu0 0
    %1128 = vmatmul.mubr.bf16.gmra.mxu0 %v1093
    %v1129 = vpop.f32.mrf.mxu0
    %v1130 = vadd.f32 0.0, %v1129
    %v1131 = vpop.f32.mrf.mxu0
    %v1132 = vpop.f32.mrf.mxu0
    %v1133 = vpop.f32.mrf.mxu0
    %1134 = vdwg.mxu0
    %v1135 = vadd.f32 %v502, %v1130
    %v1136 = vxor.u32 %v1135, 2147483648
    %v1137 = vmul.f32 %v1136, 1.442695
    %v1138 = vpow.pop %v1137
    %v1139 = vadd.f32 %v1138, 1.0
    %v1140 = vrcp.pop %v1139
    %v1141 = vmul.f32 1.0, %v1140
    %v1142 = vmul.f32 %v1141, 2.0
    %v1143 = vsub.f32 %v1142, 1.0
    %v1144 = vmul.f32 %v1141, %v1087
    %1146 = vrot.lane.b32.xlu0 %v1143, 96
    %v1147 = vpop.permute.xlu0 %1146
    %v1149 = vmul.f32 %v1141, %v1147
    %1151 = vrot.lane.b32.xlu0 %v1149, 16
    %v1152 = vpop.permute.xlu0 %1151
    %v1154 = vadd.f32 %v1144, %v1152
    %v1155 = vtanh.pop %v1154
    %1157 = vrot.lane.b32.xlu0 %v1155, 32
    %v1158 = vpop.permute.xlu0 %1157
    %v1160 = vmul.f32 %v1141, %v1158
    %vm1161 = vcmp.gt.s32.totalorder %v515, 7
    %v1162 = vsel %vm1161, 1, 0
    %1163 = vset.pattern.permute.xlu0 0
    %1164 = vperm.xlu0 %1163, %v1162
    %v1165 = vpop.permute.xlu0 %1164
    %vm1166 = vcmp.eq.s32.totalorder %v1165, 1
    %v1167 = vsel %vm1166, %v1160, %v1086
    %v1168 = vsel %vm1166, %v1154, %v1087
    %v1169 = vpack.c.bf16 %v1167, %v1167
    %1171 = vrot.lane.b32.xlu0 %v1169, 80
    %v1172 = vpop.permute.xlu0 %1171
    %v1174 = vsel %vm524, %v1172, 0
    %1176 = vmatprep.subr.bf16.mxu0 0
    %1177 = vmatpush1.bf16.msra.mxu0 0
    %1178 = vmatprep.subr.bf16.mxu0 0
    %1179 = vmatpush1.bf16.msra.mxu0 0
    %1180 = vmatprep.subr.bf16.mxu0 0
    %1181 = vmatpush1.bf16.msra.mxu0 0
    %1182 = vmatprep.subr.bf16.mxu0 0
    %1183 = vmatpush1.bf16.msra.mxu0 0
    %1184 = vmatprep.subr.bf16.mxu0 0
    %1185 = vmatpush1.bf16.msra.mxu0 0
    %1186 = vmatprep.subr.bf16.mxu0 0
    %1187 = vmatpush1.bf16.msra.mxu0 0
    %1188 = vmatprep.subr.bf16.mxu0 0
    %1189 = vmatpush1.bf16.msra.mxu0 0
    %1190 = vmatprep.subr.bf16.mxu0 0
    %1191 = vmatpush1.bf16.msra.mxu0 %v522
    %1192 = vmatprep.subr.bf16.mxu0 0
    %1193 = vmatpush2.bf16.msra.mxu0 0
    %1194 = vmatprep.subr.bf16.mxu0 0
    %1195 = vmatpush2.bf16.msra.mxu0 0
    %1196 = vmatprep.subr.bf16.mxu0 0
    %1197 = vmatpush2.bf16.msra.mxu0 0
    %1198 = vmatprep.subr.bf16.mxu0 0
    %1199 = vmatpush2.bf16.msra.mxu0 0
    %1200 = vmatprep.subr.bf16.mxu0 0
    %1201 = vmatpush2.bf16.msra.mxu0 0
    %1202 = vmatprep.subr.bf16.mxu0 0
    %1203 = vmatpush2.bf16.msra.mxu0 0
    %1204 = vmatprep.subr.bf16.mxu0 0
    %1205 = vmatpush2.bf16.msra.mxu0 0
    %1206 = vmatprep.subr.bf16.mxu0 0
    %1207 = vmatpush2.bf16.msra.mxu0 0
    %1208 = vmatprep.mubr.bf16.mxu0 0
    %1209 = vmatmul.mubr.bf16.gmra.mxu0 %v1174
    %v1210 = vpop.f32.mrf.mxu0
    %v1211 = vadd.f32 0.0, %v1210
    %v1212 = vpop.f32.mrf.mxu0
    %v1213 = vpop.f32.mrf.mxu0
    %v1214 = vpop.f32.mrf.mxu0
    %1215 = vdwg.mxu0
    %v1216 = vadd.f32 %v507, %v1211
    %v1217 = vxor.u32 %v1216, 2147483648
    %v1218 = vmul.f32 %v1217, 1.442695
    %v1219 = vpow.pop %v1218
    %v1220 = vadd.f32 %v1219, 1.0
    %v1221 = vrcp.pop %v1220
    %v1222 = vmul.f32 1.0, %v1221
    %v1223 = vmul.f32 %v1222, 2.0
    %v1224 = vsub.f32 %v1223, 1.0
    %v1225 = vmul.f32 %v1222, %v1168
    %1227 = vrot.lane.b32.xlu0 %v1224, 96
    %v1228 = vpop.permute.xlu0 %1227
    %v1230 = vmul.f32 %v1222, %v1228
    %1232 = vrot.lane.b32.xlu0 %v1230, 16
    %v1233 = vpop.permute.xlu0 %1232
    %v1235 = vadd.f32 %v1225, %v1233
    %v1236 = vtanh.pop %v1235
    %1238 = vrot.lane.b32.xlu0 %v1236, 32
    %v1239 = vpop.permute.xlu0 %1238
    %v1241 = vmul.f32 %v1222, %v1239
    %vm1242 = vcmp.gt.s32.totalorder %v515, 8
    %v1243 = vsel %vm1242, 1, 0
    %1244 = vset.pattern.permute.xlu0 0
    %1245 = vperm.xlu0 %1244, %v1243
    %v1246 = vpop.permute.xlu0 %1245
    %vm1247 = vcmp.eq.s32.totalorder %v1246, 1
    %v1248 = vsel %vm1247, %v1241, %v1167
    %v1249 = vsel %vm1247, %v1235, %v1168
    %v1250 = vpack.c.bf16 %v1248, %v1248
    %1252 = vrot.lane.b32.xlu0 %v1250, 80
    %v1253 = vpop.permute.xlu0 %1252
    %v1255 = vsel %vm524, %v1253, 0
    %1257 = vmatprep.subr.bf16.mxu0 0
    %1258 = vmatpush1.bf16.msra.mxu0 0
    %1259 = vmatprep.subr.bf16.mxu0 0
    %1260 = vmatpush1.bf16.msra.mxu0 0
    %1261 = vmatprep.subr.bf16.mxu0 0
    %1262 = vmatpush1.bf16.msra.mxu0 0
    %1263 = vmatprep.subr.bf16.mxu0 0
    %1264 = vmatpush1.bf16.msra.mxu0 0
    %1265 = vmatprep.subr.bf16.mxu0 0
    %1266 = vmatpush1.bf16.msra.mxu0 0
    %1267 = vmatprep.subr.bf16.mxu0 0
    %1268 = vmatpush1.bf16.msra.mxu0 0
    %1269 = vmatprep.subr.bf16.mxu0 0
    %1270 = vmatpush1.bf16.msra.mxu0 0
    %1271 = vmatprep.subr.bf16.mxu0 0
    %1272 = vmatpush1.bf16.msra.mxu0 %v522
    %1273 = vmatprep.subr.bf16.mxu0 0
    %1274 = vmatpush2.bf16.msra.mxu0 0
    %1275 = vmatprep.subr.bf16.mxu0 0
    %1276 = vmatpush2.bf16.msra.mxu0 0
    %1277 = vmatprep.subr.bf16.mxu0 0
    %1278 = vmatpush2.bf16.msra.mxu0 0
    %1279 = vmatprep.subr.bf16.mxu0 0
    %1280 = vmatpush2.bf16.msra.mxu0 0
    %1281 = vmatprep.subr.bf16.mxu0 0
    %1282 = vmatpush2.bf16.msra.mxu0 0
    %1283 = vmatprep.subr.bf16.mxu0 0
    %1284 = vmatpush2.bf16.msra.mxu0 0
    %1285 = vmatprep.subr.bf16.mxu0 0
    %1286 = vmatpush2.bf16.msra.mxu0 0
    %1287 = vmatprep.subr.bf16.mxu0 0
    %1288 = vmatpush2.bf16.msra.mxu0 0
    %1289 = vmatprep.mubr.bf16.mxu0 0
    %1290 = vmatmul.mubr.bf16.gmra.mxu0 %v1255
    %v1291 = vpop.f32.mrf.mxu0
    %v1292 = vadd.f32 0.0, %v1291
    %v1293 = vpop.f32.mrf.mxu0
    %v1294 = vpop.f32.mrf.mxu0
    %v1295 = vpop.f32.mrf.mxu0
    %1296 = vdwg.mxu0
    %v1297 = vadd.f32 %v512, %v1292
    %v1298 = vxor.u32 %v1297, 2147483648
    %v1299 = vmul.f32 %v1298, 1.442695
    %v1300 = vpow.pop %v1299
    %v1301 = vadd.f32 %v1300, 1.0
    %v1302 = vrcp.pop %v1301
    %v1303 = vmul.f32 1.0, %v1302
    %v1304 = vmul.f32 %v1303, 2.0
    %v1305 = vsub.f32 %v1304, 1.0
    %v1306 = vmul.f32 %v1303, %v1249
    %1308 = vrot.lane.b32.xlu0 %v1305, 96
    %v1309 = vpop.permute.xlu0 %1308
    %v1311 = vmul.f32 %v1303, %v1309
    %1313 = vrot.lane.b32.xlu0 %v1311, 16
    %v1314 = vpop.permute.xlu0 %1313
    %v1316 = vadd.f32 %v1306, %v1314
    %v1317 = vtanh.pop %v1316
    %1319 = vrot.lane.b32.xlu0 %v1317, 32
    %v1320 = vpop.permute.xlu0 %1319
    %v1322 = vmul.f32 %v1303, %v1320
    %vm1323 = vcmp.gt.s32.totalorder %v515, 9
    %v1324 = vsel %vm1323, 1, 0
    %1325 = vset.pattern.permute.xlu0 0
    %1326 = vperm.xlu0 %1325, %v1324
    %v1327 = vpop.permute.xlu0 %1326
    %vm1328 = vcmp.eq.s32.totalorder %v1327, 1
    %v1329 = vsel %vm1328, %v1322, %v1248
    %v1330 = vld [vmem:[%s8] sm:$0xff]
    %v1331 = vld [vmem:[%s8 + $0x8] sm:$0xff]
    %v1332 = vld [vmem:[%s9] sm:$0xff]
    %v1333 = vld [vmem:[%s9 + $0x8] sm:$0xff]
    %1335 = vrot.lane.b32.xlu0 %v1329, 80
    %v1336 = vpop.permute.xlu0 %1335
    %v1337 = vsel %vm524, %v1336, 0
    %1339 = vmatprep.subr.mxu0 0.0
    %1340 = vmatpush1.msra.mxu0 0.0
    %1341 = vmatprep.subr.mxu0 0.0
    %1342 = vmatpush1.msra.mxu0 0.0
    %1343 = vmatprep.subr.mxu0 0.0
    %1344 = vmatpush1.msra.mxu0 0.0
    %1345 = vmatprep.subr.mxu0 0.0
    %1346 = vmatpush1.msra.mxu0 0.0
    %1347 = vmatprep.subr.mxu0 0.0
    %1348 = vmatpush1.msra.mxu0 0.0
    %1349 = vmatprep.subr.mxu0 0.0
    %1350 = vmatpush1.msra.mxu0 0.0
    %1351 = vmatprep.subr.mxu0 0.0
    %1352 = vmatpush1.msra.mxu0 0.0
    %1353 = vmatprep.subr.mxu0 0.0
    %1354 = vmatpush1.msra.mxu0 0.0
    %1355 = vmatprep.subr.mxu0 0.0
    %1356 = vmatpush1.msra.mxu0 0.0
    %1357 = vmatprep.subr.mxu0 0.0
    %1358 = vmatpush1.msra.mxu0 0.0
    %1359 = vmatprep.subr.mxu0 0.0
    %1360 = vmatpush1.msra.mxu0 0.0
    %1361 = vmatprep.subr.mxu0 0.0
    %1362 = vmatpush1.msra.mxu0 0.0
    %1363 = vmatprep.subr.mxu0 0.0
    %1364 = vmatpush1.msra.mxu0 0.0
    %1365 = vmatprep.subr.mxu0 0.0
    %1366 = vmatpush1.msra.mxu0 0.0
    %1367 = vmatprep.subr.mxu0 0.0
    %1368 = vmatpush1.msra.mxu0 %v1333
    %1369 = vmatprep.subr.mxu0 0.0
    %1370 = vmatpush1.msra.mxu0 %v1332
    %1371 = vmatprep.subr.mxu0 0.0
    %1372 = vmatpush2.msra.mxu0 0.0
    %1373 = vmatprep.subr.mxu0 0.0
    %1374 = vmatpush2.msra.mxu0 0.0
    %1375 = vmatprep.subr.mxu0 0.0
    %1376 = vmatpush2.msra.mxu0 0.0
    %1377 = vmatprep.subr.mxu0 0.0
    %1378 = vmatpush2.msra.mxu0 0.0
    %1379 = vmatprep.subr.mxu0 0.0
    %1380 = vmatpush2.msra.mxu0 0.0
    %1381 = vmatprep.subr.mxu0 0.0
    %1382 = vmatpush2.msra.mxu0 0.0
    %1383 = vmatprep.subr.mxu0 0.0
    %1384 = vmatpush2.msra.mxu0 0.0
    %1385 = vmatprep.subr.mxu0 0.0
    %1386 = vmatpush2.msra.mxu0 0.0
    %1387 = vmatprep.subr.mxu0 0.0
    %1388 = vmatpush2.msra.mxu0 0.0
    %1389 = vmatprep.subr.mxu0 0.0
    %1390 = vmatpush2.msra.mxu0 0.0
    %1391 = vmatprep.subr.mxu0 0.0
    %1392 = vmatpush2.msra.mxu0 0.0
    %1393 = vmatprep.subr.mxu0 0.0
    %1394 = vmatpush2.msra.mxu0 0.0
    %1395 = vmatprep.subr.mxu0 0.0
    %1396 = vmatpush2.msra.mxu0 0.0
    %1397 = vmatprep.subr.mxu0 0.0
    %1398 = vmatpush2.msra.mxu0 0.0
    %1399 = vmatprep.subr.mxu0 0.0
    %1400 = vmatpush2.msra.mxu0 0.0
    %1401 = vmatprep.subr.mxu0 0.0
    %1402 = vmatpush2.msra.mxu0 0.0
    %1403 = vmatprep.mubr.f32.mxu0 0.0
    %1404 = vmatmul.mubr.f32.gmra.mxu0 %v1337
    %v1405 = vpop.f32.mrf.mxu0
    %v1406 = vadd.f32 0.0, %v1405
    %v1407 = vpop.f32.mrf.mxu0
    %1408 = vdwg.mxu0
    %v1410 = vsel %vm524, %v134, 0
    %1412 = vmatprep.subr.mxu0 0.0
    %1413 = vmatpush1.msra.mxu0 0.0
    %1414 = vmatprep.subr.mxu0 0.0
    %1415 = vmatpush1.msra.mxu0 0.0
    %1416 = vmatprep.subr.mxu0 0.0
    %1417 = vmatpush1.msra.mxu0 0.0
    %1418 = vmatprep.subr.mxu0 0.0
    %1419 = vmatpush1.msra.mxu0 0.0
    %1420 = vmatprep.subr.mxu0 0.0
    %1421 = vmatpush1.msra.mxu0 0.0
    %1422 = vmatprep.subr.mxu0 0.0
    %1423 = vmatpush1.msra.mxu0 0.0
    %1424 = vmatprep.subr.mxu0 0.0
    %1425 = vmatpush1.msra.mxu0 0.0
    %1426 = vmatprep.subr.mxu0 0.0
    %1427 = vmatpush1.msra.mxu0 0.0
    %1428 = vmatprep.subr.mxu0 0.0
    %1429 = vmatpush1.msra.mxu0 0.0
    %1430 = vmatprep.subr.mxu0 0.0
    %1431 = vmatpush1.msra.mxu0 0.0
    %1432 = vmatprep.subr.mxu0 0.0
    %1433 = vmatpush1.msra.mxu0 0.0
    %1434 = vmatprep.subr.mxu0 0.0
    %1435 = vmatpush1.msra.mxu0 0.0
    %1436 = vmatprep.subr.mxu0 0.0
    %1437 = vmatpush1.msra.mxu0 0.0
    %1438 = vmatprep.subr.mxu0 0.0
    %1439 = vmatpush1.msra.mxu0 0.0
    %1440 = vmatprep.subr.mxu0 0.0
    %1441 = vmatpush1.msra.mxu0 %v1331
    %1442 = vmatprep.subr.mxu0 0.0
    %1443 = vmatpush1.msra.mxu0 %v1330
    %1444 = vmatprep.subr.mxu0 0.0
    %1445 = vmatpush2.msra.mxu0 0.0
    %1446 = vmatprep.subr.mxu0 0.0
    %1447 = vmatpush2.msra.mxu0 0.0
    %1448 = vmatprep.subr.mxu0 0.0
    %1449 = vmatpush2.msra.mxu0 0.0
    %1450 = vmatprep.subr.mxu0 0.0
    %1451 = vmatpush2.msra.mxu0 0.0
    %1452 = vmatprep.subr.mxu0 0.0
    %1453 = vmatpush2.msra.mxu0 0.0
    %1454 = vmatprep.subr.mxu0 0.0
    %1455 = vmatpush2.msra.mxu0 0.0
    %1456 = vmatprep.subr.mxu0 0.0
    %1457 = vmatpush2.msra.mxu0 0.0
    %1458 = vmatprep.subr.mxu0 0.0
    %1459 = vmatpush2.msra.mxu0 0.0
    %1460 = vmatprep.subr.mxu0 0.0
    %1461 = vmatpush2.msra.mxu0 0.0
    %1462 = vmatprep.subr.mxu0 0.0
    %1463 = vmatpush2.msra.mxu0 0.0
    %1464 = vmatprep.subr.mxu0 0.0
    %1465 = vmatpush2.msra.mxu0 0.0
    %1466 = vmatprep.subr.mxu0 0.0
    %1467 = vmatpush2.msra.mxu0 0.0
    %1468 = vmatprep.subr.mxu0 0.0
    %1469 = vmatpush2.msra.mxu0 0.0
    %1470 = vmatprep.subr.mxu0 0.0
    %1471 = vmatpush2.msra.mxu0 0.0
    %1472 = vmatprep.subr.mxu0 0.0
    %1473 = vmatpush2.msra.mxu0 0.0
    %1474 = vmatprep.subr.mxu0 0.0
    %1475 = vmatpush2.msra.mxu0 0.0
    %1476 = vmatprep.mubr.f32.mxu0 0.0
    %1477 = vmatmul.mubr.f32.gmra.mxu0 %v1410
    %v1478 = vpop.f32.mrf.mxu0
    %v1479 = vadd.f32 %v1406, %v1478
    %v1480 = vpop.f32.mrf.mxu0
    %1481 = vdwg.mxu0
    %v1482 = vld [vmem:[%s11] sm:$0x1]
    %v1484 = vlaneseq
    %v1485 = vshrl.u32 %v1484, 7
    %v1486 = vsub.s32 0, %v1485
    %v1487 = vrot.slane %v1482, %v1486
    %v1489 = vadd.f32 %v1479, %v1487
    %v1490 = vld [vmem:[%s10] sm:$0xf]
    %v1491 = vld [vmem:[%s10 + $0x4] sm:$0xf]
    %v1492 = vld [vmem:[%s10 + $0x8] sm:$0xf]
    %v1493 = vld [vmem:[%s10 + $0xc] sm:$0xf]
    %v1498 = vunpack.c.l.b16 %v1490
    %v1499 = vunpack.c.l.b16 %v1491
    %v1500 = vunpack.c.l.b16 %v1492
    %v1501 = vunpack.c.l.b16 %v1493
    %v1502 = vpack.c.b16 %v1499, %v1498
    %v1503 = vpack.c.b16 %v1501, %v1500
    %vm1506 = vcmask 261120
    %v1507 = vsel %vm1506, 0, 0
    %1509 = vmatprep.subr.bf16.mxu0 0
    %1510 = vmatpush1.bf16.msra.mxu0 0
    %1511 = vmatprep.subr.bf16.mxu0 0
    %1512 = vmatpush1.bf16.msra.mxu0 0
    %1513 = vmatprep.subr.bf16.mxu0 0
    %1514 = vmatpush1.bf16.msra.mxu0 0
    %1515 = vmatprep.subr.bf16.mxu0 0
    %1516 = vmatpush1.bf16.msra.mxu0 0
    %1517 = vmatprep.subr.bf16.mxu0 0
    %1518 = vmatpush1.bf16.msra.mxu0 0
    %1519 = vmatprep.subr.bf16.mxu0 0
    %1520 = vmatpush1.bf16.msra.mxu0 0
    %1521 = vmatprep.subr.bf16.mxu0 0
    %1522 = vmatpush1.bf16.msra.mxu0 %v1503
    %1523 = vmatprep.subr.bf16.mxu0 0
    %1524 = vmatpush1.bf16.msra.mxu0 %v1502
    %1525 = vmatprep.subr.bf16.mxu0 0
    %1526 = vmatpush2.bf16.msra.mxu0 0
    %1527 = vmatprep.subr.bf16.mxu0 0
    %1528 = vmatpush2.bf16.msra.mxu0 0
    %1529 = vmatprep.subr.bf16.mxu0 0
    %1530 = vmatpush2.bf16.msra.mxu0 0
    %1531 = vmatprep.subr.bf16.mxu0 0
    %1532 = vmatpush2.bf16.msra.mxu0 0
    %1533 = vmatprep.subr.bf16.mxu0 0
    %1534 = vmatpush2.bf16.msra.mxu0 0
    %1535 = vmatprep.subr.bf16.mxu0 0
    %1536 = vmatpush2.bf16.msra.mxu0 0
    %1537 = vmatprep.subr.bf16.mxu0 0
    %1538 = vmatpush2.bf16.msra.mxu0 0
    %1539 = vmatprep.subr.bf16.mxu0 0
    %1540 = vmatpush2.bf16.msra.mxu0 0
    %1541 = vmatprep.mubr.bf16.mxu0 0
    %1542 = vmatmul.mubr.bf16.gmra.mxu0 %v1507
    %v1543 = vpop.f32.mrf.mxu0
    %v1544 = vadd.f32 0.0, %v1543
    %v1545 = vpop.f32.mrf.mxu0
    %v1546 = vpop.f32.mrf.mxu0
    %v1547 = vpop.f32.mrf.mxu0
    %1548 = vdwg.mxu0
    %v1549 = vadd.f32 %v1489, %v1544
    %v1550 = vxor.u32 %v1549, 2147483648
    %v1551 = vmul.f32 %v1550, 1.442695
    %v1552 = vpow.pop %v1551
    %v1553 = vadd.f32 %v1552, 1.0
    %v1554 = vrcp.pop %v1553
    %v1555 = vmul.f32 1.0, %v1554
    %v1556 = vmul.f32 %v1555, 2.0
    %v1557 = vsub.f32 %v1556, 1.0
    %v1558 = vmul.f32 %v1555, 0.0
    %1560 = vrot.lane.b32.xlu0 %v1557, 64
    %v1561 = vpop.permute.xlu0 %1560
    %v1563 = vmul.f32 %v1555, %v1561
    %1565 = vrot.lane.b32.xlu0 %v1563, 32
    %v1566 = vpop.permute.xlu0 %1565
    %v1568 = vadd.f32 %v1558, %v1566
    %v1569 = vtanh.pop %v1568
    %1571 = vrot.lane.b32.xlu0 %v1569, 64
    %v1572 = vpop.permute.xlu0 %1571
    %v1574 = vmul.f32 %v1555, %v1572
    %v1575 = vpack.c.bf16 %v1574, %v1574
    %1577 = vrot.lane.b32.xlu0 %v1575, 32
    %v1578 = vpop.permute.xlu0 %1577
    %v1580 = vsel %vm1506, %v1578, 0
    %1582 = vmatprep.subr.bf16.mxu0 0
    %1583 = vmatpush1.bf16.msra.mxu0 0
    %1584 = vmatprep.subr.bf16.mxu0 0
    %1585 = vmatpush1.bf16.msra.mxu0 0
    %1586 = vmatprep.subr.bf16.mxu0 0
    %1587 = vmatpush1.bf16.msra.mxu0 0
    %1588 = vmatprep.subr.bf16.mxu0 0
    %1589 = vmatpush1.bf16.msra.mxu0 0
    %1590 = vmatprep.subr.bf16.mxu0 0
    %1591 = vmatpush1.bf16.msra.mxu0 0
    %1592 = vmatprep.subr.bf16.mxu0 0
    %1593 = vmatpush1.bf16.msra.mxu0 0
    %1594 = vmatprep.subr.bf16.mxu0 0
    %1595 = vmatpush1.bf16.msra.mxu0 %v1503
    %1596 = vmatprep.subr.bf16.mxu0 0
    %1597 = vmatpush1.bf16.msra.mxu0 %v1502
    %1598 = vmatprep.subr.bf16.mxu0 0
    %1599 = vmatpush2.bf16.msra.mxu0 0
    %1600 = vmatprep.subr.bf16.mxu0 0
    %1601 = vmatpush2.bf16.msra.mxu0 0
    %1602 = vmatprep.subr.bf16.mxu0 0
    %1603 = vmatpush2.bf16.msra.mxu0 0
    %1604 = vmatprep.subr.bf16.mxu0 0
    %1605 = vmatpush2.bf16.msra.mxu0 0
    %1606 = vmatprep.subr.bf16.mxu0 0
    %1607 = vmatpush2.bf16.msra.mxu0 0
    %1608 = vmatprep.subr.bf16.mxu0 0
    %1609 = vmatpush2.bf16.msra.mxu0 0
    %1610 = vmatprep.subr.bf16.mxu0 0
    %1611 = vmatpush2.bf16.msra.mxu0 0
    %1612 = vmatprep.subr.bf16.mxu0 0
    %1613 = vmatpush2.bf16.msra.mxu0 0
    %1614 = vmatprep.mubr.bf16.mxu0 0
    %1615 = vmatmul.mubr.bf16.gmra.mxu0 %v1580
    %v1616 = vpop.f32.mrf.mxu0
    %v1617 = vadd.f32 0.0, %v1616
    %v1618 = vpop.f32.mrf.mxu0
    %v1619 = vpop.f32.mrf.mxu0
    %v1620 = vpop.f32.mrf.mxu0
    %1621 = vdwg.mxu0
    %v1623 = vrot.slane %v1617, 7
    %v1625 = vadd.f32 %v1489, %v1623
    %v1626 = vxor.u32 %v1625, 2147483648
    %v1627 = vmul.f32 %v1626, 1.442695
    %v1628 = vpow.pop %v1627
    %v1629 = vadd.f32 %v1628, 1.0
    %v1630 = vrcp.pop %v1629
    %v1631 = vmul.f32 1.0, %v1630
    %v1632 = vmul.f32 %v1631, 2.0
    %v1633 = vsub.f32 %v1632, 1.0
    %v1635 = vrot.slane %v1568, 7
    %v1637 = vmul.f32 %v1631, %v1635
    %1639 = vrot.lane.b32.xlu0 %v1633, 64
    %v1640 = vpop.permute.xlu0 %1639
    %v1642 = vmul.f32 %v1631, %v1640
    %1644 = vrot.lane.b32.xlu0 %v1642, 32
    %v1645 = vpop.permute.xlu0 %1644
    %v1647 = vadd.f32 %v1637, %v1645
    %v1648 = vtanh.pop %v1647
    %1650 = vrot.lane.b32.xlu0 %v1648, 64
    %v1651 = vpop.permute.xlu0 %1650
    %v1653 = vmul.f32 %v1631, %v1651
    %v1654 = vpack.c.bf16 %v1653, %v1653
    %v1656 = vshrl.u32 %v1654, 16
    %1658 = vrot.lane.b32.xlu0 %v1656, 32
    %v1659 = vpop.permute.xlu0 %1658
    %v1661 = vsel %vm1506, %v1659, 0
    %1663 = vmatprep.subr.bf16.mxu0 0
    %1664 = vmatpush1.bf16.msra.mxu0 0
    %1665 = vmatprep.subr.bf16.mxu0 0
    %1666 = vmatpush1.bf16.msra.mxu0 0
    %1667 = vmatprep.subr.bf16.mxu0 0
    %1668 = vmatpush1.bf16.msra.mxu0 0
    %1669 = vmatprep.subr.bf16.mxu0 0
    %1670 = vmatpush1.bf16.msra.mxu0 0
    %1671 = vmatprep.subr.bf16.mxu0 0
    %1672 = vmatpush1.bf16.msra.mxu0 0
    %1673 = vmatprep.subr.bf16.mxu0 0
    %1674 = vmatpush1.bf16.msra.mxu0 0
    %1675 = vmatprep.subr.bf16.mxu0 0
    %1676 = vmatpush1.bf16.msra.mxu0 %v1503
    %1677 = vmatprep.subr.bf16.mxu0 0
    %1678 = vmatpush1.bf16.msra.mxu0 %v1502
    %1679 = vmatprep.subr.bf16.mxu0 0
    %1680 = vmatpush2.bf16.msra.mxu0 0
    %1681 = vmatprep.subr.bf16.mxu0 0
    %1682 = vmatpush2.bf16.msra.mxu0 0
    %1683 = vmatprep.subr.bf16.mxu0 0
    %1684 = vmatpush2.bf16.msra.mxu0 0
    %1685 = vmatprep.subr.bf16.mxu0 0
    %1686 = vmatpush2.bf16.msra.mxu0 0
    %1687 = vmatprep.subr.bf16.mxu0 0
    %1688 = vmatpush2.bf16.msra.mxu0 0
    %1689 = vmatprep.subr.bf16.mxu0 0
    %1690 = vmatpush2.bf16.msra.mxu0 0
    %1691 = vmatprep.subr.bf16.mxu0 0
    %1692 = vmatpush2.bf16.msra.mxu0 0
    %1693 = vmatprep.subr.bf16.mxu0 0
    %1694 = vmatpush2.bf16.msra.mxu0 0
    %1695 = vmatprep.mubr.bf16.mxu0 0
    %1696 = vmatmul.mubr.bf16.gmra.mxu0 %v1661
    %v1697 = vpop.f32.mrf.mxu0
    %v1698 = vadd.f32 0.0, %v1697
    %v1699 = vpop.f32.mrf.mxu0
    %v1700 = vpop.f32.mrf.mxu0
    %v1701 = vpop.f32.mrf.mxu0
    %1702 = vdwg.mxu0
    %v1704 = vrot.slane %v1698, 6
    %v1706 = vadd.f32 %v1489, %v1704
    %v1707 = vxor.u32 %v1706, 2147483648
    %v1708 = vmul.f32 %v1707, 1.442695
    %v1709 = vpow.pop %v1708
    %v1710 = vadd.f32 %v1709, 1.0
    %v1711 = vrcp.pop %v1710
    %v1712 = vmul.f32 1.0, %v1711
    %v1713 = vmul.f32 %v1712, 2.0
    %v1714 = vsub.f32 %v1713, 1.0
    %v1716 = vrot.slane %v1647, 7
    %v1718 = vmul.f32 %v1712, %v1716
    %1720 = vrot.lane.b32.xlu0 %v1714, 64
    %v1721 = vpop.permute.xlu0 %1720
    %v1723 = vmul.f32 %v1712, %v1721
    %1725 = vrot.lane.b32.xlu0 %v1723, 32
    %v1726 = vpop.permute.xlu0 %1725
    %v1728 = vadd.f32 %v1718, %v1726
    %v1729 = vtanh.pop %v1728
    %1731 = vrot.lane.b32.xlu0 %v1729, 64
    %v1732 = vpop.permute.xlu0 %1731
    %v1734 = vmul.f32 %v1712, %v1732
    %v1735 = vpack.c.bf16 %v1734, %v1734
    %v1737 = vrot.slane %v1735, 1
    %1738 = vrot.lane.b32.xlu0 %v1737, 32
    %v1739 = vpop.permute.xlu0 %1738
    %v1741 = vsel %vm1506, %v1739, 0
    %1743 = vmatprep.subr.bf16.mxu0 0
    %1744 = vmatpush1.bf16.msra.mxu0 0
    %1745 = vmatprep.subr.bf16.mxu0 0
    %1746 = vmatpush1.bf16.msra.mxu0 0
    %1747 = vmatprep.subr.bf16.mxu0 0
    %1748 = vmatpush1.bf16.msra.mxu0 0
    %1749 = vmatprep.subr.bf16.mxu0 0
    %1750 = vmatpush1.bf16.msra.mxu0 0
    %1751 = vmatprep.subr.bf16.mxu0 0
    %1752 = vmatpush1.bf16.msra.mxu0 0
    %1753 = vmatprep.subr.bf16.mxu0 0
    %1754 = vmatpush1.bf16.msra.mxu0 0
    %1755 = vmatprep.subr.bf16.mxu0 0
    %1756 = vmatpush1.bf16.msra.mxu0 %v1503
    %1757 = vmatprep.subr.bf16.mxu0 0
    %1758 = vmatpush1.bf16.msra.mxu0 %v1502
    %1759 = vmatprep.subr.bf16.mxu0 0
    %1760 = vmatpush2.bf16.msra.mxu0 0
    %1761 = vmatprep.subr.bf16.mxu0 0
    %1762 = vmatpush2.bf16.msra.mxu0 0
    %1763 = vmatprep.subr.bf16.mxu0 0
    %1764 = vmatpush2.bf16.msra.mxu0 0
    %1765 = vmatprep.subr.bf16.mxu0 0
    %1766 = vmatpush2.bf16.msra.mxu0 0
    %1767 = vmatprep.subr.bf16.mxu0 0
    %1768 = vmatpush2.bf16.msra.mxu0 0
    %1769 = vmatprep.subr.bf16.mxu0 0
    %1770 = vmatpush2.bf16.msra.mxu0 0
    %1771 = vmatprep.subr.bf16.mxu0 0
    %1772 = vmatpush2.bf16.msra.mxu0 0
    %1773 = vmatprep.subr.bf16.mxu0 0
    %1774 = vmatpush2.bf16.msra.mxu0 0
    %1775 = vmatprep.mubr.bf16.mxu0 0
    %1776 = vmatmul.mubr.bf16.gmra.mxu0 %v1741
    %v1777 = vpop.f32.mrf.mxu0
    %v1778 = vadd.f32 0.0, %v1777
    %v1779 = vpop.f32.mrf.mxu0
    %v1780 = vpop.f32.mrf.mxu0
    %v1781 = vpop.f32.mrf.mxu0
    %1782 = vdwg.mxu0
    %v1784 = vrot.slane %v1778, 5
    %v1786 = vadd.f32 %v1489, %v1784
    %v1787 = vxor.u32 %v1786, 2147483648
    %v1788 = vmul.f32 %v1787, 1.442695
    %v1789 = vpow.pop %v1788
    %v1790 = vadd.f32 %v1789, 1.0
    %v1791 = vrcp.pop %v1790
    %v1792 = vmul.f32 1.0, %v1791
    %v1793 = vmul.f32 %v1792, 2.0
    %v1794 = vsub.f32 %v1793, 1.0
    %v1796 = vrot.slane %v1728, 7
    %v1798 = vmul.f32 %v1792, %v1796
    %1800 = vrot.lane.b32.xlu0 %v1794, 64
    %v1801 = vpop.permute.xlu0 %1800
    %v1803 = vmul.f32 %v1792, %v1801
    %1805 = vrot.lane.b32.xlu0 %v1803, 32
    %v1806 = vpop.permute.xlu0 %1805
    %v1808 = vadd.f32 %v1798, %v1806
    %v1809 = vtanh.pop %v1808
    %1811 = vrot.lane.b32.xlu0 %v1809, 64
    %v1812 = vpop.permute.xlu0 %1811
    %v1814 = vmul.f32 %v1792, %v1812
    %v1815 = vpack.c.bf16 %v1814, %v1814
    %v1817 = vshrl.u32 %v1815, 16
    %v1819 = vrot.slane %v1817, 1
    %1820 = vrot.lane.b32.xlu0 %v1819, 32
    %v1821 = vpop.permute.xlu0 %1820
    %v1823 = vsel %vm1506, %v1821, 0
    %1825 = vmatprep.subr.bf16.mxu0 0
    %1826 = vmatpush1.bf16.msra.mxu0 0
    %1827 = vmatprep.subr.bf16.mxu0 0
    %1828 = vmatpush1.bf16.msra.mxu0 0
    %1829 = vmatprep.subr.bf16.mxu0 0
    %1830 = vmatpush1.bf16.msra.mxu0 0
    %1831 = vmatprep.subr.bf16.mxu0 0
    %1832 = vmatpush1.bf16.msra.mxu0 0
    %1833 = vmatprep.subr.bf16.mxu0 0
    %1834 = vmatpush1.bf16.msra.mxu0 0
    %1835 = vmatprep.subr.bf16.mxu0 0
    %1836 = vmatpush1.bf16.msra.mxu0 0
    %1837 = vmatprep.subr.bf16.mxu0 0
    %1838 = vmatpush1.bf16.msra.mxu0 %v1503
    %1839 = vmatprep.subr.bf16.mxu0 0
    %1840 = vmatpush1.bf16.msra.mxu0 %v1502
    %1841 = vmatprep.subr.bf16.mxu0 0
    %1842 = vmatpush2.bf16.msra.mxu0 0
    %1843 = vmatprep.subr.bf16.mxu0 0
    %1844 = vmatpush2.bf16.msra.mxu0 0
    %1845 = vmatprep.subr.bf16.mxu0 0
    %1846 = vmatpush2.bf16.msra.mxu0 0
    %1847 = vmatprep.subr.bf16.mxu0 0
    %1848 = vmatpush2.bf16.msra.mxu0 0
    %1849 = vmatprep.subr.bf16.mxu0 0
    %1850 = vmatpush2.bf16.msra.mxu0 0
    %1851 = vmatprep.subr.bf16.mxu0 0
    %1852 = vmatpush2.bf16.msra.mxu0 0
    %1853 = vmatprep.subr.bf16.mxu0 0
    %1854 = vmatpush2.bf16.msra.mxu0 0
    %1855 = vmatprep.subr.bf16.mxu0 0
    %1856 = vmatpush2.bf16.msra.mxu0 0
    %1857 = vmatprep.mubr.bf16.mxu0 0
    %1858 = vmatmul.mubr.bf16.gmra.mxu0 %v1823
    %v1859 = vpop.f32.mrf.mxu0
    %v1860 = vadd.f32 0.0, %v1859
    %v1861 = vpop.f32.mrf.mxu0
    %v1862 = vpop.f32.mrf.mxu0
    %v1863 = vpop.f32.mrf.mxu0
    %1864 = vdwg.mxu0
    %v1866 = vrot.slane %v1860, 4
    %v1868 = vadd.f32 %v1489, %v1866
    %v1869 = vxor.u32 %v1868, 2147483648
    %v1870 = vmul.f32 %v1869, 1.442695
    %v1871 = vpow.pop %v1870
    %v1872 = vadd.f32 %v1871, 1.0
    %v1873 = vrcp.pop %v1872
    %v1874 = vmul.f32 1.0, %v1873
    %v1875 = vmul.f32 %v1874, 2.0
    %v1876 = vsub.f32 %v1875, 1.0
    %v1878 = vrot.slane %v1808, 7
    %v1880 = vmul.f32 %v1874, %v1878
    %1882 = vrot.lane.b32.xlu0 %v1876, 64
    %v1883 = vpop.permute.xlu0 %1882
    %v1885 = vmul.f32 %v1874, %v1883
    %1887 = vrot.lane.b32.xlu0 %v1885, 32
    %v1888 = vpop.permute.xlu0 %1887
    %v1890 = vadd.f32 %v1880, %v1888
    %v1891 = vtanh.pop %v1890
    %1893 = vrot.lane.b32.xlu0 %v1891, 64
    %v1894 = vpop.permute.xlu0 %1893
    %v1896 = vmul.f32 %v1874, %v1894
    %v1897 = vpack.c.bf16 %v1896, %v1896
    %v1899 = vrot.slane %v1897, 2
    %1900 = vrot.lane.b32.xlu0 %v1899, 32
    %v1901 = vpop.permute.xlu0 %1900
    %v1903 = vsel %vm1506, %v1901, 0
    %1905 = vmatprep.subr.bf16.mxu0 0
    %1906 = vmatpush1.bf16.msra.mxu0 0
    %1907 = vmatprep.subr.bf16.mxu0 0
    %1908 = vmatpush1.bf16.msra.mxu0 0
    %1909 = vmatprep.subr.bf16.mxu0 0
    %1910 = vmatpush1.bf16.msra.mxu0 0
    %1911 = vmatprep.subr.bf16.mxu0 0
    %1912 = vmatpush1.bf16.msra.mxu0 0
    %1913 = vmatprep.subr.bf16.mxu0 0
    %1914 = vmatpush1.bf16.msra.mxu0 0
    %1915 = vmatprep.subr.bf16.mxu0 0
    %1916 = vmatpush1.bf16.msra.mxu0 0
    %1917 = vmatprep.subr.bf16.mxu0 0
    %1918 = vmatpush1.bf16.msra.mxu0 %v1503
    %1919 = vmatprep.subr.bf16.mxu0 0
    %1920 = vmatpush1.bf16.msra.mxu0 %v1502
    %1921 = vmatprep.subr.bf16.mxu0 0
    %1922 = vmatpush2.bf16.msra.mxu0 0
    %1923 = vmatprep.subr.bf16.mxu0 0
    %1924 = vmatpush2.bf16.msra.mxu0 0
    %1925 = vmatprep.subr.bf16.mxu0 0
    %1926 = vmatpush2.bf16.msra.mxu0 0
    %1927 = vmatprep.subr.bf16.mxu0 0
    %1928 = vmatpush2.bf16.msra.mxu0 0
    %1929 = vmatprep.subr.bf16.mxu0 0
    %1930 = vmatpush2.bf16.msra.mxu0 0
    %1931 = vmatprep.subr.bf16.mxu0 0
    %1932 = vmatpush2.bf16.msra.mxu0 0
    %1933 = vmatprep.subr.bf16.mxu0 0
    %1934 = vmatpush2.bf16.msra.mxu0 0
    %1935 = vmatprep.subr.bf16.mxu0 0
    %1936 = vmatpush2.bf16.msra.mxu0 0
    %1937 = vmatprep.mubr.bf16.mxu0 0
    %1938 = vmatmul.mubr.bf16.gmra.mxu0 %v1903
    %v1939 = vpop.f32.mrf.mxu0
    %v1940 = vadd.f32 0.0, %v1939
    %v1941 = vpop.f32.mrf.mxu0
    %v1942 = vpop.f32.mrf.mxu0
    %v1943 = vpop.f32.mrf.mxu0
    %1944 = vdwg.mxu0
    %v1946 = vrot.slane %v1940, 3
    %v1948 = vadd.f32 %v1489, %v1946
    %v1949 = vxor.u32 %v1948, 2147483648
    %v1950 = vmul.f32 %v1949, 1.442695
    %v1951 = vpow.pop %v1950
    %v1952 = vadd.f32 %v1951, 1.0
    %v1953 = vrcp.pop %v1952
    %v1954 = vmul.f32 1.0, %v1953
    %v1955 = vmul.f32 %v1954, 2.0
    %v1956 = vsub.f32 %v1955, 1.0
    %v1958 = vrot.slane %v1890, 7
    %v1960 = vmul.f32 %v1954, %v1958
    %1962 = vrot.lane.b32.xlu0 %v1956, 64
    %v1963 = vpop.permute.xlu0 %1962
    %v1965 = vmul.f32 %v1954, %v1963
    %1967 = vrot.lane.b32.xlu0 %v1965, 32
    %v1968 = vpop.permute.xlu0 %1967
    %v1970 = vadd.f32 %v1960, %v1968
    %v1971 = vtanh.pop %v1970
    %1973 = vrot.lane.b32.xlu0 %v1971, 64
    %v1974 = vpop.permute.xlu0 %1973
    %v1976 = vmul.f32 %v1954, %v1974
    %v1977 = vpack.c.bf16 %v1976, %v1976
    %v1979 = vshrl.u32 %v1977, 16
    %v1981 = vrot.slane %v1979, 2
    %1982 = vrot.lane.b32.xlu0 %v1981, 32
    %v1983 = vpop.permute.xlu0 %1982
    %v1985 = vsel %vm1506, %v1983, 0
    %1987 = vmatprep.subr.bf16.mxu0 0
    %1988 = vmatpush1.bf16.msra.mxu0 0
    %1989 = vmatprep.subr.bf16.mxu0 0
    %1990 = vmatpush1.bf16.msra.mxu0 0
    %1991 = vmatprep.subr.bf16.mxu0 0
    %1992 = vmatpush1.bf16.msra.mxu0 0
    %1993 = vmatprep.subr.bf16.mxu0 0
    %1994 = vmatpush1.bf16.msra.mxu0 0
    %1995 = vmatprep.subr.bf16.mxu0 0
    %1996 = vmatpush1.bf16.msra.mxu0 0
    %1997 = vmatprep.subr.bf16.mxu0 0
    %1998 = vmatpush1.bf16.msra.mxu0 0
    %1999 = vmatprep.subr.bf16.mxu0 0
    %2000 = vmatpush1.bf16.msra.mxu0 %v1503
    %2001 = vmatprep.subr.bf16.mxu0 0
    %2002 = vmatpush1.bf16.msra.mxu0 %v1502
    %2003 = vmatprep.subr.bf16.mxu0 0
    %2004 = vmatpush2.bf16.msra.mxu0 0
    %2005 = vmatprep.subr.bf16.mxu0 0
    %2006 = vmatpush2.bf16.msra.mxu0 0
    %2007 = vmatprep.subr.bf16.mxu0 0
    %2008 = vmatpush2.bf16.msra.mxu0 0
    %2009 = vmatprep.subr.bf16.mxu0 0
    %2010 = vmatpush2.bf16.msra.mxu0 0
    %2011 = vmatprep.subr.bf16.mxu0 0
    %2012 = vmatpush2.bf16.msra.mxu0 0
    %2013 = vmatprep.subr.bf16.mxu0 0
    %2014 = vmatpush2.bf16.msra.mxu0 0
    %2015 = vmatprep.subr.bf16.mxu0 0
    %2016 = vmatpush2.bf16.msra.mxu0 0
    %2017 = vmatprep.subr.bf16.mxu0 0
    %2018 = vmatpush2.bf16.msra.mxu0 0
    %2019 = vmatprep.mubr.bf16.mxu0 0
    %2020 = vmatmul.mubr.bf16.gmra.mxu0 %v1985
    %v2021 = vpop.f32.mrf.mxu0
    %v2022 = vadd.f32 0.0, %v2021
    %v2023 = vpop.f32.mrf.mxu0
    %v2024 = vpop.f32.mrf.mxu0
    %v2025 = vpop.f32.mrf.mxu0
    %2026 = vdwg.mxu0
    %v2028 = vrot.slane %v2022, 2
    %v2030 = vadd.f32 %v1489, %v2028
    %v2031 = vxor.u32 %v2030, 2147483648
    %v2032 = vmul.f32 %v2031, 1.442695
    %v2033 = vpow.pop %v2032
    %v2034 = vadd.f32 %v2033, 1.0
    %v2035 = vrcp.pop %v2034
    %v2036 = vmul.f32 1.0, %v2035
    %v2037 = vmul.f32 %v2036, 2.0
    %v2038 = vsub.f32 %v2037, 1.0
    %v2040 = vrot.slane %v1970, 7
    %v2042 = vmul.f32 %v2036, %v2040
    %2044 = vrot.lane.b32.xlu0 %v2038, 64
    %v2045 = vpop.permute.xlu0 %2044
    %v2047 = vmul.f32 %v2036, %v2045
    %2049 = vrot.lane.b32.xlu0 %v2047, 32
    %v2050 = vpop.permute.xlu0 %2049
    %v2052 = vadd.f32 %v2042, %v2050
    %v2053 = vtanh.pop %v2052
    %2055 = vrot.lane.b32.xlu0 %v2053, 64
    %v2056 = vpop.permute.xlu0 %2055
    %v2058 = vmul.f32 %v2036, %v2056
    %v2059 = vpack.c.bf16 %v2058, %v2058
    %v2061 = vrot.slane %v2059, 3
    %2062 = vrot.lane.b32.xlu0 %v2061, 32
    %v2063 = vpop.permute.xlu0 %2062
    %v2065 = vsel %vm1506, %v2063, 0
    %2067 = vmatprep.subr.bf16.mxu0 0
    %2068 = vmatpush1.bf16.msra.mxu0 0
    %2069 = vmatprep.subr.bf16.mxu0 0
    %2070 = vmatpush1.bf16.msra.mxu0 0
    %2071 = vmatprep.subr.bf16.mxu0 0
    %2072 = vmatpush1.bf16.msra.mxu0 0
    %2073 = vmatprep.subr.bf16.mxu0 0
    %2074 = vmatpush1.bf16.msra.mxu0 0
    %2075 = vmatprep.subr.bf16.mxu0 0
    %2076 = vmatpush1.bf16.msra.mxu0 0
    %2077 = vmatprep.subr.bf16.mxu0 0
    %2078 = vmatpush1.bf16.msra.mxu0 0
    %2079 = vmatprep.subr.bf16.mxu0 0
    %2080 = vmatpush1.bf16.msra.mxu0 %v1503
    %2081 = vmatprep.subr.bf16.mxu0 0
    %2082 = vmatpush1.bf16.msra.mxu0 %v1502
    %2083 = vmatprep.subr.bf16.mxu0 0
    %2084 = vmatpush2.bf16.msra.mxu0 0
    %2085 = vmatprep.subr.bf16.mxu0 0
    %2086 = vmatpush2.bf16.msra.mxu0 0
    %2087 = vmatprep.subr.bf16.mxu0 0
    %2088 = vmatpush2.bf16.msra.mxu0 0
    %2089 = vmatprep.subr.bf16.mxu0 0
    %2090 = vmatpush2.bf16.msra.mxu0 0
    %2091 = vmatprep.subr.bf16.mxu0 0
    %2092 = vmatpush2.bf16.msra.mxu0 0
    %2093 = vmatprep.subr.bf16.mxu0 0
    %2094 = vmatpush2.bf16.msra.mxu0 0
    %2095 = vmatprep.subr.bf16.mxu0 0
    %2096 = vmatpush2.bf16.msra.mxu0 0
    %2097 = vmatprep.subr.bf16.mxu0 0
    %2098 = vmatpush2.bf16.msra.mxu0 0
    %2099 = vmatprep.mubr.bf16.mxu0 0
    %2100 = vmatmul.mubr.bf16.gmra.mxu0 %v2065
    %v2101 = vpop.f32.mrf.mxu0
    %v2102 = vadd.f32 0.0, %v2101
    %v2103 = vpop.f32.mrf.mxu0
    %v2104 = vpop.f32.mrf.mxu0
    %v2105 = vpop.f32.mrf.mxu0
    %2106 = vdwg.mxu0
    %v2108 = vrot.slane %v2102, 1
    %v2110 = vadd.f32 %v1489, %v2108
    %v2111 = vxor.u32 %v2110, 2147483648
    %v2112 = vmul.f32 %v2111, 1.442695
    %v2113 = vpow.pop %v2112
    %v2114 = vadd.f32 %v2113, 1.0
    %v2115 = vrcp.pop %v2114
    %v2116 = vmul.f32 1.0, %v2115
    %v2117 = vmul.f32 %v2116, 2.0
    %v2118 = vsub.f32 %v2117, 1.0
    %v2120 = vrot.slane %v2052, 7
    %v2122 = vmul.f32 %v2116, %v2120
    %2124 = vrot.lane.b32.xlu0 %v2118, 64
    %v2125 = vpop.permute.xlu0 %2124
    %v2127 = vmul.f32 %v2116, %v2125
    %2129 = vrot.lane.b32.xlu0 %v2127, 32
    %v2130 = vpop.permute.xlu0 %2129
    %v2132 = vadd.f32 %v2122, %v2130
    %v2133 = vtanh.pop %v2132
    %2135 = vrot.lane.b32.xlu0 %v2133, 64
    %v2136 = vpop.permute.xlu0 %2135
    %v2138 = vmul.f32 %v2116, %v2136
    %vm2139 = vcmask 1040384
    %v2140 = vsel %vm2139, %v1574, %v1653
    %v2141 = vsel %vm242, %v2140, %v1734
    %vm2142 = vcmask 1042432
    %v2143 = vsel %vm2142, %v2141, %v1814
    %vm2144 = vcmask 1043456
    %v2145 = vsel %vm2144, %v2143, %v1896
    %vm2146 = vcmask 1044480
    %v2147 = vsel %vm2146, %v2145, %v1976
    %vm2148 = vcmask 1045504
    %v2149 = vsel %vm2148, %v2147, %v2058
    %vm2150 = vcmask 1046528
    %v2151 = vsel %vm2150, %v2149, %v2138
    %v2152 = vld [vmem:[%s12] sm:$0xff]
    %v2153 = vld [vmem:[%s12 + $0x8] sm:$0xff]
    %v2154 = vld [vmem:[%s12 + $0x10] sm:$0xff]
    %v2155 = vld [vmem:[%s12 + $0x18] sm:$0xff]
    %v2156 = vld [vmem:[%s13] sm:$0x1]
    %v2158 = vlaneseq
    %v2159 = vshrl.u32 %v2158, 7
    %v2160 = vsub.s32 0, %v2159
    %v2161 = vrot.slane %v2156, %v2160
    %2164 = vrot.lane.b32.xlu0 %v2151, 32
    %v2165 = vpop.permute.xlu0 %2164
    %v2166 = vsel %vm1506, %v2165, 0
    %2168 = vmatprep.subr.mxu0 0.0
    %2169 = vmatpush1.msra.mxu0 0.0
    %2170 = vmatprep.subr.mxu0 0.0
    %2171 = vmatpush1.msra.mxu0 0.0
    %2172 = vmatprep.subr.mxu0 0.0
    %2173 = vmatpush1.msra.mxu0 0.0
    %2174 = vmatprep.subr.mxu0 0.0
    %2175 = vmatpush1.msra.mxu0 0.0
    %2176 = vmatprep.subr.mxu0 0.0
    %2177 = vmatpush1.msra.mxu0 0.0
    %2178 = vmatprep.subr.mxu0 0.0
    %2179 = vmatpush1.msra.mxu0 0.0
    %2180 = vmatprep.subr.mxu0 0.0
    %2181 = vmatpush1.msra.mxu0 0.0
    %2182 = vmatprep.subr.mxu0 0.0
    %2183 = vmatpush1.msra.mxu0 0.0
    %2184 = vmatprep.subr.mxu0 0.0
    %2185 = vmatpush1.msra.mxu0 0.0
    %2186 = vmatprep.subr.mxu0 0.0
    %2187 = vmatpush1.msra.mxu0 0.0
    %2188 = vmatprep.subr.mxu0 0.0
    %2189 = vmatpush1.msra.mxu0 0.0
    %2190 = vmatprep.subr.mxu0 0.0
    %2191 = vmatpush1.msra.mxu0 0.0
    %2192 = vmatprep.subr.mxu0 0.0
    %2193 = vmatpush1.msra.mxu0 %v2155
    %2194 = vmatprep.subr.mxu0 0.0
    %2195 = vmatpush1.msra.mxu0 %v2154
    %2196 = vmatprep.subr.mxu0 0.0
    %2197 = vmatpush1.msra.mxu0 %v2153
    %2198 = vmatprep.subr.mxu0 0.0
    %2199 = vmatpush1.msra.mxu0 %v2152
    %2200 = vmatprep.subr.mxu0 0.0
    %2201 = vmatpush2.msra.mxu0 0.0
    %2202 = vmatprep.subr.mxu0 0.0
    %2203 = vmatpush2.msra.mxu0 0.0
    %2204 = vmatprep.subr.mxu0 0.0
    %2205 = vmatpush2.msra.mxu0 0.0
    %2206 = vmatprep.subr.mxu0 0.0
    %2207 = vmatpush2.msra.mxu0 0.0
    %2208 = vmatprep.subr.mxu0 0.0
    %2209 = vmatpush2.msra.mxu0 0.0
    %2210 = vmatprep.subr.mxu0 0.0
    %2211 = vmatpush2.msra.mxu0 0.0
    %2212 = vmatprep.subr.mxu0 0.0
    %2213 = vmatpush2.msra.mxu0 0.0
    %2214 = vmatprep.subr.mxu0 0.0
    %2215 = vmatpush2.msra.mxu0 0.0
    %2216 = vmatprep.subr.mxu0 0.0
    %2217 = vmatpush2.msra.mxu0 0.0
    %2218 = vmatprep.subr.mxu0 0.0
    %2219 = vmatpush2.msra.mxu0 0.0
    %2220 = vmatprep.subr.mxu0 0.0
    %2221 = vmatpush2.msra.mxu0 0.0
    %2222 = vmatprep.subr.mxu0 0.0
    %2223 = vmatpush2.msra.mxu0 0.0
    %2224 = vmatprep.subr.mxu0 0.0
    %2225 = vmatpush2.msra.mxu0 0.0
    %2226 = vmatprep.subr.mxu0 0.0
    %2227 = vmatpush2.msra.mxu0 0.0
    %2228 = vmatprep.subr.mxu0 0.0
    %2229 = vmatpush2.msra.mxu0 0.0
    %2230 = vmatprep.subr.mxu0 0.0
    %2231 = vmatpush2.msra.mxu0 0.0
    %2232 = vmatprep.mubr.f32.mxu0 0.0
    %2233 = vmatmul.mubr.f32.gmra.mxu0 %v2166
    %v2234 = vpop.f32.mrf.mxu0
    %v2235 = vadd.f32 %v2161, %v2234
    %v2236 = vpop.f32.mrf.mxu0
    %2237 = vdwg.mxu0
    %2238 = vmax.xlane.f32.xlu0 %v2235
    %v2239 = vpop.xlane.xlu0 %2238
    %v2240 = vsub.f32 %v2235, %v2239
    %v2241 = vmul.f32 %v2240, 1.442695
    %v2242 = vpow.pop %v2241
    %2243 = vadd.xlane.f32.xlu0 %v2242
    %v2244 = vpop.xlane.xlu0 %2243
    %v2245 = vlog2.pop %v2244
    %v2246 = vmul.f32 %v2245, 0.6931472
    %v2247 = vsub.f32 %v2240, %v2246
    %2248 = vst [vmem:[#allocation2] sm:$0xff] %v2247
    // Predicated region
    $region58: #{tpu_custom_call.1} parent=1 // pred_check
      _
    $region59: #{tpu_custom_call.1} parent=1 // pred_check_branch
      %2250 = sbr.rel (0) target = $region61
    $region60: #{tpu_custom_call.1} parent=1 // pred_region
      %s2252 = ssub.s32 128, 128
      %2253 = vsyncadd [#allocation3], %s2252
      %s2255 = sshll.u32 [#allocation2], 4
      %s2256 = int_to_ptr.vmem [resolvable:$true] %s2255
      %2258 = dma.vmem_to_hbm [thread:$0]  %s2256, 128, %s14, [#allocation3]
    $region61: #{tpu_custom_call.1} parent=1 // pred_fallthru
      _
    // Predicated region
    $region62: #{tpu_custom_call.1} parent=1 // pred_check
      _
    $region63: #{tpu_custom_call.1} parent=1 // pred_check_branch
      %2260 = sbr.rel (0) target = $region65
    $region64: #{tpu_custom_call.1} parent=1 // pred_region
      %2261 = dma.done [#allocation3], 128
    $region65: #{tpu_custom_call.1} parent=1 // pred_fallthru
      _
    %2262 = vsyncpa [#allocation3], 1

</llo_original>
